<compile_context>
chip_gen: v6e
topology: v6e:2x2x1
jax: 0.10.0
libtpu: 0.0.40
codegen_flags: <defaults>
</compile_context>

<pallas_src>
import functools

import jax
import jax.numpy as jnp
from jax.experimental import pallas as pl
from jax.experimental.pallas import tpu as pltpu


def _downsample_kernel(p_ref, w_ref, o_ref, *, eps, slope):
    # p_ref : (1, K, M)   im2col patches for one sample (K = Cin*k^3, M = Do*Ho*Wo)
    # w_ref : (Cout, K)   flattened conv weights (channel-major, (kd,kh,kw) minor)
    # o_ref : (1, Cout, M)
    # Single fat-K GEMM on the MXU, f32 accumulation, lane-dense (M on lanes) output.
    y = jnp.dot(w_ref[...], p_ref[0], preferred_element_type=jnp.float32)  # (Cout, M)

    # InstanceNorm3d (no affine, biased variance, eps inside rsqrt) over the M voxels.
    mean = jnp.mean(y, axis=1, keepdims=True)
    centered = y - mean
    var = jnp.mean(centered * centered, axis=1, keepdims=True)
    yn = centered * jax.lax.rsqrt(var + eps)
    # LeakyReLU
    o_ref[0] = jnp.where(yn >= 0, yn, slope * yn).astype(o_ref.dtype)


def downsample_block(x, w, *, stride=2, eps=1e-5, negative_slope=0.01):
    """Conv3d(k, stride, pad=k//2, bias=False) -> InstanceNorm3d -> LeakyReLU.

    x: (N, Cin, D, H, W) float32; w: (Cout, Cin, k, k, k) PyTorch-layout weights.
    Returns (N, Cout, Do, Ho, Wo) in NCDHW layout, matching the PyTorch module.
    """
    n, cin, d, h, wdim = x.shape
    cout, cin_w, k, kh_, kw_ = w.shape
    assert cin_w == cin and k == kh_ == kw_
    pad = k // 2

    do = (d + 2 * pad - k) // stride + 1
    ho = (h + 2 * pad - k) // stride + 1
    wo = (wdim + 2 * pad - k) // stride + 1
    m = do * ho * wo
    kdim = cin * k * k * k

    # ---- wrapper-side im2col (layout plumbing only, no conv compute hoisted) ----
    # Feature ordering of the patches is channel-major with (kd, kh, kw) minor,
    # which matches w.reshape(Cout, Cin*k^3).  HIGHEST precision keeps the
    # identity-filter gather exact in f32.
    patches = jax.lax.conv_general_dilated_patches(
        x, (k, k, k), (stride,) * 3, [(pad, pad)] * 3,
        dimension_numbers=("NCDHW", "OIDHW", "NCDHW"),
        precision=jax.lax.Precision.HIGHEST)            # (N, Cin*k^3, Do, Ho, Wo)
    patches = patches.reshape(n, kdim, m)                # (N, K, M) -- M lane-dense
    w_flat = w.reshape(cout, kdim)                       # (Cout, K)

    kernel = functools.partial(_downsample_kernel, eps=eps, slope=negative_slope)

    out = pl.pallas_call(
        kernel,
        out_shape=jax.ShapeDtypeStruct((n, cout, m), x.dtype),
        grid=(n,),
        in_specs=[
            pl.BlockSpec((1, kdim, m), lambda i: (i, 0, 0)),
            pl.BlockSpec((cout, kdim), lambda i: (0, 0)),
        ],
        out_specs=pl.BlockSpec((1, cout, m), lambda i: (i, 0, 0)),
        compiler_params=pltpu.CompilerParams(
            dimension_semantics=("parallel",),
            vmem_limit_bytes=16 * 1024 * 1024),
    )(patches, w_flat)

    # (N, Cout, M) -> (N, Cout, Do, Ho, Wo): already NCDHW, no transpose needed.
    return out.reshape(n, cout, do, ho, wo)


def _reference(x, w, *, eps=1e-5, negative_slope=0.01):
    """Pure-JAX reference with high-precision conv (matches the PyTorch forward)."""
    out = jax.lax.conv_general_dilated(
        x, w, window_strides=(2, 2, 2), padding=[(3, 3)] * 3,
        dimension_numbers=("NCDHW", "OIDHW", "NCDHW"),
        precision=jax.lax.Precision.HIGHEST)
    mean = out.mean(axis=(2, 3, 4), keepdims=True)
    var = ((out - mean) ** 2).mean(axis=(2, 3, 4), keepdims=True)
    yn = (out - mean) * jax.lax.rsqrt(var + eps)
    return jnp.where(yn >= 0, yn, negative_slope * yn)


if __name__ == "__main__":
    batch, in_dim, out_dim, spatial, ksize = 2, 4, 8, 16, 7

    key = jax.random.PRNGKey(0)
    kx, kw = jax.random.split(key)
    x = jax.random.normal(kx, (batch, in_dim, spatial, spatial, spatial),
                          dtype=jnp.float32)
    # nn.Conv3d default init: uniform(+/- 1/sqrt(fan_in)), fan_in = Cin * k^3
    lim = 1.0 / float(jnp.sqrt(in_dim * ksize * ksize * ksize))
    w = jax.random.uniform(kw, (out_dim, in_dim, ksize, ksize, ksize),
                           jnp.float32, -lim, lim)

    y = downsample_block(x, w)
    y = jax.block_until_ready(y)

    ref = _reference(x, w)
    assert y.shape == (batch, out_dim, spatial // 2, spatial // 2, spatial // 2)
    max_err = float(jnp.max(jnp.abs(y - ref)))
    assert jnp.allclose(y, ref, atol=1e-3, rtol=1e-3), max_err

    print("KERNEL_OK")
</pallas_src>

<mosaic_0001>
module attributes {stable_mosaic.version = 11 : i64} {
  func.func @_downsample_kernel(%arg0: i32, %arg1: memref<1x1372x512xf32, #tpu.memory_space<vmem>>, %arg2: memref<8x1372xf32, #tpu.memory_space<vmem>>, %arg3: memref<1x8x512xf32, #tpu.memory_space<vmem>>) attributes {dimension_semantics = [#tpu.dimension_semantics<parallel>], iteration_bounds = array<i64: 2>, scalar_prefetch = 0 : i64, scratch_operands = 0 : i64, tpu.core_type = #tpu.core_type<tc>, window_params = [{transform_indices = @transform_0, window_bounds = array<i64: 1, 1372, 512>}, {pipeline_mode = #tpu.pipeline_mode<synchronous>, transform_indices = @transform_1, window_bounds = array<i64: 8, 1372>}, {transform_indices = @transform_2, window_bounds = array<i64: 1, 8, 512>}]} {
    %c0 = arith.constant 0 : index
    %c0_0 = arith.constant 0 : index
    %0 = vector.load %arg2[%c0, %c0_0] : memref<8x1372xf32, #tpu.memory_space<vmem>>, vector<8x1372xf32>
    %c0_1 = arith.constant 0 : index
    %c0_2 = arith.constant 0 : index
    %c0_3 = arith.constant 0 : index
    %1 = vector.load %arg1[%c0_1, %c0_2, %c0_3] : memref<1x1372x512xf32, #tpu.memory_space<vmem>>, vector<1x1372x512xf32>
    %2 = vector.shape_cast %1 : vector<1x1372x512xf32> to vector<1372x512xf32>
    %cst = arith.constant dense<0.000000e+00> : vector<8x512xf32>
    %3 = tpu.matmul %0, %2, %cst {dimension_numbers = #tpu.dot_dimension_numbers<[1], [0], [0], [1], [0, 0, 1, 1], [], []>} : vector<8x1372xf32>, vector<1372x512xf32>, vector<8x512xf32> -> vector<8x512xf32>
    %cst_4 = arith.constant dense<0.000000e+00> : vector<8xf32>
    %4 = vector.multi_reduction <add>, %3, %cst_4 [1] : vector<8x512xf32> to vector<8xf32>
    %5 = vector.shape_cast %4 : vector<8xf32> to vector<8x1xf32>
    %cst_5 = arith.constant 5.120000e+02 : f32
    %6 = vector.broadcast %cst_5 : f32 to vector<8x1xf32>
    %7 = arith.divf %5, %6 : vector<8x1xf32>
    %8 = vector.broadcast %7 : vector<8x1xf32> to vector<8x512xf32>
    %9 = arith.subf %3, %8 : vector<8x512xf32>
    %10 = arith.mulf %9, %9 : vector<8x512xf32>
    %cst_6 = arith.constant dense<0.000000e+00> : vector<8xf32>
    %11 = vector.multi_reduction <add>, %10, %cst_6 [1] : vector<8x512xf32> to vector<8xf32>
    %12 = vector.shape_cast %11 : vector<8xf32> to vector<8x1xf32>
    %cst_7 = arith.constant 5.120000e+02 : f32
    %13 = vector.broadcast %cst_7 : f32 to vector<8x1xf32>
    %14 = arith.divf %12, %13 : vector<8x1xf32>
    %cst_8 = arith.constant 9.99999974E-6 : f32
    %15 = vector.broadcast %cst_8 : f32 to vector<8x1xf32>
    %16 = arith.addf %14, %15 : vector<8x1xf32>
    %17 = math.rsqrt %16 : vector<8x1xf32>
    %18 = vector.broadcast %17 : vector<8x1xf32> to vector<8x512xf32>
    %19 = arith.mulf %9, %18 : vector<8x512xf32>
    %cst_9 = arith.constant 0.000000e+00 : f32
    %20 = vector.broadcast %cst_9 : f32 to vector<8x512xf32>
    %21 = arith.cmpf oge, %19, %20 : vector<8x512xf32>
    %cst_10 = arith.constant 0.00999999977 : f32
    %22 = vector.broadcast %cst_10 : f32 to vector<8x512xf32>
    %23 = arith.mulf %22, %19 : vector<8x512xf32>
    %24 = arith.select %21, %19, %23 : vector<8x512xi1>, vector<8x512xf32>
    %c0_11 = arith.constant 0 : index
    %c0_12 = arith.constant 0 : index
    %c0_13 = arith.constant 0 : index
    %25 = vector.load %arg3[%c0_11, %c0_12, %c0_13] : memref<1x8x512xf32, #tpu.memory_space<vmem>>, vector<1x8x512xf32>
    %26 = vector.shape_cast %25 : vector<1x8x512xf32> to vector<8x512xf32>
    %27 = vector.shape_cast %24 : vector<8x512xf32> to vector<1x8x512xf32>
    tpu.vector_store %arg3[%c0_11, %c0_12, %c0_13], %27 {strides = array<i32>} : memref<1x8x512xf32, #tpu.memory_space<vmem>>, vector<1x8x512xf32>,
    return
  }
  func.func @transform_0(%arg0: i32) -> (i32, i32, i32) {
    %c0_i32 = arith.constant 0 : i32
    %c0_i32_0 = arith.constant 0 : i32
    %c0_i32_1 = arith.constant 0 : i32
    return %arg0, %c0_i32, %c0_i32_0 : i32, i32, i32
  }
  func.func @transform_1(%arg0: i32) -> (i32, i32) {
    %c0_i32 = arith.constant 0 : i32
    %c0_i32_0 = arith.constant 0 : i32
    %c0_i32_1 = arith.constant 0 : i32
    return %c0_i32, %c0_i32_0 : i32, i32
  }
  func.func @transform_2(%arg0: i32) -> (i32, i32, i32) {
    %c0_i32 = arith.constant 0 : i32
    %c0_i32_0 = arith.constant 0 : i32
    %c0_i32_1 = arith.constant 0 : i32
    return %arg0, %c0_i32, %c0_i32_0 : i32, i32, i32
  }
}

</mosaic_0001>

<llo_original>
// kernel: tpu_custom_call.1
$region0: #{tpu_custom_call.1}
  #allocation0 [shape = 'u32[]', space=smem, size = 0x4, offset = 0x4, fixed_abs, tag = 'smem constant byte address 0x4 - core index']
  #allocation1 [shape = 'u32[144,128]{1,0:T(1,128)}', space=vmem, size = 0x12000, scoped, tag = 'internal scratch']
  %s0 = inlined_call_operand.vmem [shape: f32[2,1372,512], index: 0, kind: input, shape index: {}]
  %s1 = inlined_call_operand.vmem [shape: f32[8,1372], index: 1, kind: input, shape index: {}]
  %s2 = inlined_call_operand.hbm [shape: f32[2,8,512], index: 2, kind: output, shape index: {}]
  %s3 = sld [smem:[#allocation0]]
  $region41: #{tpu_custom_call.1} parent=0
    _
  %s5 = ssub.s32 1, %s3
  %s6 = scalar_select 0, %s5, %s3
  $region1: #{tpu_custom_call.1} parent=0
    #allocation2 [shape = 'u8[32768]{0}', space=vmem, size = 0x8000, scoped, tag = 'output window, operand 0']
    #allocation3 [shape = 's32[2]{0}', space=sflag, size = 0x8, scoped, tag = 'scoped memory for tpu_custom_call.1']
    %7 = vsyncpa [#allocation3], 0
    %s8 = scalar_lea.sflag [#allocation3], 1
    %9 = vsyncpa %s8, 0
    loop: start=0, step=1, limit=4
    $region2: #{tpu_custom_call.1} parent=1 // loop_pre_header
      _
    $region3: #{tpu_custom_call.1} parent=1 // loop_header
      %s11 = sphi 0, %s15
      %p12 = scmp.ge.s32.totalorder %s11, 4
      %s21 = sphi 0, %s23
      %s24 = sphi 0, %s21
      %s25 = sphi 0, %s24
      %s41 = sphi 0, %s25
      %s45 = sphi 0, %s45
      %s47 = sphi 0, %s45
      %s48 = sphi 0, %s47
      %s62 = sphi 0, %s48
      %s68 = sphi 0, %s70
      %s71 = sphi 0, %s68
      %s72 = sphi 0, %s71
      %s88 = sphi 0, %s72
    $region4: #{tpu_custom_call.1} parent=1 // loop_header_branch
      %14 = sbr.rel (%p12) target = $region8
    $region5: #{tpu_custom_call.1} parent=1 // loop_body
      %s16 = ssub.s32 %s11, 1
      %s17 = ssub.s32 %s11, 2
      %s18 = sadd.s32 %s11, 1
      %s19 = ssub.s32 %s11, %s18
      %p20 = scmp.eq.s32.totalorder %s19, 0
      %s22 = sadd.s32 %s21, 1
      %s23 = scalar_select %p20, %s21, %s22
      %p26 = pneg %p20
      %p27 = scmp.eq.s32.totalorder %s11, 1
      %p28 = por %p26, %p27
      %p29 = scmp.ne.s32.totalorder %s21, %s24
      %p30 = scmp.eq.s32.totalorder %s11, 0
      %p31 = por %p29, %p30
      %p32 = scmp.ne.s32.totalorder %s21, %s24
      %p33 = scmp.eq.s32.totalorder %s16, 1
      %p34 = por %p32, %p33
      %p35 = scmp.ne.s32.totalorder %s24, %s25
      %p36 = scmp.eq.s32.totalorder %s16, 0
      %p37 = por %p35, %p36
      %p38 = scmp.ne.s32.totalorder %s24, %s25
      %p39 = scmp.eq.s32.totalorder %s17, 1
      %p40 = por %p38, %p39
      %p42 = scmp.ne.s32.totalorder %s25, %s41
      %p43 = scmp.eq.s32.totalorder %s17, 0
      %p44 = por %p42, %p43
      %s46 = sadd.s32 %s45, 1
      %p49 = scmp.eq.s32.totalorder %s11, 1
      %p50 = scmp.ne.s32.totalorder %s45, %s47
      %p51 = scmp.eq.s32.totalorder %s11, 0
      %p52 = por %p50, %p51
      %p53 = scmp.ne.s32.totalorder %s45, %s47
      %p54 = scmp.eq.s32.totalorder %s16, 1
      %p55 = por %p53, %p54
      %p56 = scmp.ne.s32.totalorder %s47, %s48
      %p57 = scmp.eq.s32.totalorder %s16, 0
      %p58 = por %p56, %p57
      %p59 = scmp.ne.s32.totalorder %s47, %s48
      %p60 = scmp.eq.s32.totalorder %s17, 1
      %p61 = por %p59, %p60
      %p63 = scmp.ne.s32.totalorder %s48, %s62
      %p64 = scmp.eq.s32.totalorder %s17, 0
      %p65 = por %p63, %p64
      %s66 = ssub.s32 %s11, %s18
      %p67 = scmp.eq.s32.totalorder %s66, 0
      %s69 = sadd.s32 %s68, 1
      %s70 = scalar_select %p67, %s68, %s69
      %p73 = pneg %p67
      %p74 = scmp.eq.s32.totalorder %s11, 1
      %p75 = por %p73, %p74
      %p76 = scmp.ne.s32.totalorder %s68, %s71
      %p77 = scmp.eq.s32.totalorder %s11, 0
      %p78 = por %p76, %p77
      %p79 = scmp.ne.s32.totalorder %s68, %s71
      %p80 = scmp.eq.s32.totalorder %s16, 1
      %p81 = por %p79, %p80
      %p82 = scmp.ne.s32.totalorder %s71, %s72
      %p83 = scmp.eq.s32.totalorder %s16, 0
      %p84 = por %p82, %p83
      %p85 = scmp.ne.s32.totalorder %s71, %s72
      %p86 = scmp.eq.s32.totalorder %s17, 1
      %p87 = por %p85, %p86
      %p89 = scmp.ne.s32.totalorder %s72, %s88
      %p90 = scmp.eq.s32.totalorder %s17, 0
      %p91 = por %p89, %p90
      %p92 = scmp.le.s32.totalorder 1, %s11
      %p93 = scmp.lt.s32.totalorder %s11, 3
      %p94 = pnand %p92, %p93
      %p95 = pneg %p94
      // Predicated region
      $region9: #{tpu_custom_call.1} parent=5 // pred_check
        _
      $region10: #{tpu_custom_call.1} parent=5 // pred_check_branch
        %97 = sbr.rel (%p94) target = $region12
      $region11: #{tpu_custom_call.1} parent=5 // pred_region
        %s98 = ssub.s32 %s11, 1
        // Predicated region
        $region13: #{tpu_custom_call.1} parent=11 // pred_check
          %p99 = pneg %p58
        $region14: #{tpu_custom_call.1} parent=11 // pred_check_branch
          %101 = sbr.rel (%p99) target = $region16
        $region15: #{tpu_custom_call.1} parent=11 // pred_region
          _
        $region16: #{tpu_custom_call.1} parent=11 // pred_fallthru
          _
      $region12: #{tpu_custom_call.1} parent=5 // pred_fallthru
        _
      %p102 = scmp.lt.s32.totalorder %s11, 2
      // Predicated region
      $region17: #{tpu_custom_call.1} parent=5 // pred_check
        %p103 = pneg %p102
      $region18: #{tpu_custom_call.1} parent=5 // pred_check_branch
        %105 = sbr.rel (%p103) target = $region20
      $region19: #{tpu_custom_call.1} parent=5 // pred_region
        // Predicated region
        $region21: #{tpu_custom_call.1} parent=19 // pred_check
          %p106 = pneg %p31
        $region22: #{tpu_custom_call.1} parent=19 // pred_check_branch
          %108 = sbr.rel (%p106) target = $region24
        $region23: #{tpu_custom_call.1} parent=19 // pred_region
          %p109 = scmp.lt.s32.totalorder %s11, 1
          %s110 = scalar_select %p109, %s11, 1
          %s111 = smul.addr %s110, 688
          %s112 = smul.addr %s111, 8
          %s113 = scalar_lea.vmem %s0, %s112
        $region24: #{tpu_custom_call.1} parent=19 // pred_fallthru
          _
      $region20: #{tpu_custom_call.1} parent=5 // pred_fallthru
        _
      %p114 = scmp.le.s32.totalorder 1, %s11
      %p115 = scmp.lt.s32.totalorder %s11, 3
      %p116 = pnand %p114, %p115
      %p117 = pneg %p116
      // Predicated region
      $region25: #{tpu_custom_call.1} parent=5 // pred_check
        _
      $region26: #{tpu_custom_call.1} parent=5 // pred_check_branch
        %119 = sbr.rel (%p116) target = $region28
      $region27: #{tpu_custom_call.1} parent=5 // pred_region
        %s120 = ssub.s32 %s11, 1
        %p121 = scmp.lt.s32.totalorder %s16, 1
        %s122 = scalar_select %p121, %s16, 1
        %s123 = smul.addr %s122, 688
        %s124 = smul.addr %s123, 8
        %s125 = scalar_lea.vmem %s0, %s124
        %p126 = pneg %p37
        %p127 = pneg %p34
        %p128 = pneg %p58
        %p129 = pneg %p55
        %p130 = pneg %p84
        %p131 = pneg %p81
        %s132 = sand.u32 %s71, 1
        %s133 = scalar_lea.sflag [#allocation3], %s132
        %s134 = sand.u32 %s71, 1
        %s135 = smul.addr %s134, 32
        %s136 = scalar_lea.vmem [#allocation2], %s135
        %p137 = scmp.lt.s32.totalorder %s16, 1
        %s138 = scalar_select %p137, %s16, 1
        %s139 = smul.addr %s138, 688
        %s140 = smul.addr %s139, 8
        %s141 = scalar_lea.vmem %s0, %s140
        %v142 = vld [vmem:[%s1] sm:$0xff]
        %v143 = vld [vmem:[%s1 + $0x8] sm:$0xff]
        %v144 = vld [vmem:[%s1 + $0x10] sm:$0xff]
        %v145 = vld [vmem:[%s1 + $0x18] sm:$0xff]
        %v146 = vld [vmem:[%s1 + $0x20] sm:$0xff]
        %v147 = vld [vmem:[%s1 + $0x28] sm:$0xff]
        %v148 = vld [vmem:[%s1 + $0x30] sm:$0xff]
        %v149 = vld [vmem:[%s1 + $0x38] sm:$0xff]
        %v150 = vld [vmem:[%s1 + $0x40] sm:$0xff]
        %v151 = vld [vmem:[%s1 + $0x48] sm:$0xff]
        %v152 = vld [vmem:[%s1 + $0x50] sm:$0xff]
        %v153 = vld [vmem:[%s141] sm:$0xff]
        %v154 = vld [vmem:[%s141 + $0x8] sm:$0xff]
        %v155 = vld [vmem:[%s141 + $0x10] sm:$0xff]
        %v156 = vld [vmem:[%s141 + $0x18] sm:$0xff]
        %v157 = vld [vmem:[%s141 + $0x20] sm:$0xff]
        %v158 = vld [vmem:[%s141 + $0x28] sm:$0xff]
        %v159 = vld [vmem:[%s141 + $0x30] sm:$0xff]
        %v160 = vld [vmem:[%s141 + $0x38] sm:$0xff]
        %v161 = vld [vmem:[%s141 + $0x40] sm:$0xff]
        %v162 = vld [vmem:[%s141 + $0x48] sm:$0xff]
        %v163 = vld [vmem:[%s141 + $0x50] sm:$0xff]
        %v164 = vld [vmem:[%s141 + $0x58] sm:$0xff]
        %v165 = vld [vmem:[%s141 + $0x60] sm:$0xff]
        %v166 = vld [vmem:[%s141 + $0x68] sm:$0xff]
        %v167 = vld [vmem:[%s141 + $0x70] sm:$0xff]
        %v168 = vld [vmem:[%s141 + $0x78] sm:$0xff]
        %v169 = vld [vmem:[%s141 + $0x80] sm:$0xff]
        %v170 = vld [vmem:[%s141 + $0x88] sm:$0xff]
        %v171 = vld [vmem:[%s141 + $0x90] sm:$0xff]
        %v172 = vld [vmem:[%s141 + $0x98] sm:$0xff]
        %v173 = vld [vmem:[%s141 + $0xa0] sm:$0xff]
        %v174 = vld [vmem:[%s141 + $0xa8] sm:$0xff]
        %v175 = vld [vmem:[%s141 + $0xb0] sm:$0xff]
        %v176 = vld [vmem:[%s141 + $0xb8] sm:$0xff]
        %v177 = vld [vmem:[%s141 + $0xc0] sm:$0xff]
        %v178 = vld [vmem:[%s141 + $0xc8] sm:$0xff]
        %v179 = vld [vmem:[%s141 + $0xd0] sm:$0xff]
        %v180 = vld [vmem:[%s141 + $0xd8] sm:$0xff]
        %v181 = vld [vmem:[%s141 + $0xe0] sm:$0xff]
        %v182 = vld [vmem:[%s141 + $0xe8] sm:$0xff]
        %v183 = vld [vmem:[%s141 + $0xf0] sm:$0xff]
        %v184 = vld [vmem:[%s141 + $0xf8] sm:$0xff]
        %v185 = vld [vmem:[%s141 + $0x100] sm:$0xff]
        %v186 = vld [vmem:[%s141 + $0x108] sm:$0xff]
        %v187 = vld [vmem:[%s141 + $0x110] sm:$0xff]
        %v188 = vld [vmem:[%s141 + $0x118] sm:$0xff]
        %v189 = vld [vmem:[%s141 + $0x120] sm:$0xff]
        %v190 = vld [vmem:[%s141 + $0x128] sm:$0xff]
        %v191 = vld [vmem:[%s141 + $0x130] sm:$0xff]
        %v192 = vld [vmem:[%s141 + $0x138] sm:$0xff]
        %v193 = vld [vmem:[%s141 + $0x140] sm:$0xff]
        %v194 = vld [vmem:[%s141 + $0x148] sm:$0xff]
        %v195 = vld [vmem:[%s141 + $0x150] sm:$0xff]
        %v196 = vld [vmem:[%s141 + $0x158] sm:$0xff]
        %v197 = vld [vmem:[%s141 + $0x160] sm:$0xff]
        %v198 = vld [vmem:[%s141 + $0x168] sm:$0xff]
        %v199 = vld [vmem:[%s141 + $0x170] sm:$0xff]
        %v200 = vld [vmem:[%s141 + $0x178] sm:$0xff]
        %v201 = vld [vmem:[%s141 + $0x180] sm:$0xff]
        %v202 = vld [vmem:[%s141 + $0x188] sm:$0xff]
        %v203 = vld [vmem:[%s141 + $0x190] sm:$0xff]
        %v204 = vld [vmem:[%s141 + $0x198] sm:$0xff]
        %v205 = vld [vmem:[%s141 + $0x1a0] sm:$0xff]
        %v206 = vld [vmem:[%s141 + $0x1a8] sm:$0xff]
        %v207 = vld [vmem:[%s141 + $0x1b0] sm:$0xff]
        %v208 = vld [vmem:[%s141 + $0x1b8] sm:$0xff]
        %v209 = vld [vmem:[%s141 + $0x1c0] sm:$0xff]
        %v210 = vld [vmem:[%s141 + $0x1c8] sm:$0xff]
        %v211 = vld [vmem:[%s141 + $0x1d0] sm:$0xff]
        %v212 = vld [vmem:[%s141 + $0x1d8] sm:$0xff]
        %v213 = vld [vmem:[%s141 + $0x1e0] sm:$0xff]
        %v214 = vld [vmem:[%s141 + $0x1e8] sm:$0xff]
        %v215 = vld [vmem:[%s141 + $0x1f0] sm:$0xff]
        %v216 = vld [vmem:[%s141 + $0x1f8] sm:$0xff]
        %v217 = vld [vmem:[%s141 + $0x200] sm:$0xff]
        %v218 = vld [vmem:[%s141 + $0x208] sm:$0xff]
        %v219 = vld [vmem:[%s141 + $0x210] sm:$0xff]
        %v220 = vld [vmem:[%s141 + $0x218] sm:$0xff]
        %v221 = vld [vmem:[%s141 + $0x220] sm:$0xff]
        %v222 = vld [vmem:[%s141 + $0x228] sm:$0xff]
        %v223 = vld [vmem:[%s141 + $0x230] sm:$0xff]
        %v224 = vld [vmem:[%s141 + $0x238] sm:$0xff]
        %v225 = vld [vmem:[%s141 + $0x240] sm:$0xff]
        %v226 = vld [vmem:[%s141 + $0x248] sm:$0xff]
        %v227 = vld [vmem:[%s141 + $0x250] sm:$0xff]
        %v228 = vld [vmem:[%s141 + $0x258] sm:$0xff]
        %v229 = vld [vmem:[%s141 + $0x260] sm:$0xff]
        %v230 = vld [vmem:[%s141 + $0x268] sm:$0xff]
        %v231 = vld [vmem:[%s141 + $0x270] sm:$0xff]
        %v232 = vld [vmem:[%s141 + $0x278] sm:$0xff]
        %v233 = vld [vmem:[%s141 + $0x280] sm:$0xff]
        %v234 = vld [vmem:[%s141 + $0x288] sm:$0xff]
        %v235 = vld [vmem:[%s141 + $0x290] sm:$0xff]
        %v236 = vld [vmem:[%s141 + $0x298] sm:$0xff]
        %v237 = vld [vmem:[%s141 + $0x2a0] sm:$0xff]
        %v238 = vld [vmem:[%s141 + $0x2a8] sm:$0xff]
        %v239 = vld [vmem:[%s141 + $0x2b0] sm:$0xff]
        %v240 = vld [vmem:[%s141 + $0x2b8] sm:$0xff]
        %v241 = vld [vmem:[%s141 + $0x2c0] sm:$0xff]
        %v242 = vld [vmem:[%s141 + $0x2c8] sm:$0xff]
        %v243 = vld [vmem:[%s141 + $0x2d0] sm:$0xff]
        %v244 = vld [vmem:[%s141 + $0x2d8] sm:$0xff]
        %v245 = vld [vmem:[%s141 + $0x2e0] sm:$0xff]
        %v246 = vld [vmem:[%s141 + $0x2e8] sm:$0xff]
        %v247 = vld [vmem:[%s141 + $0x2f0] sm:$0xff]
        %v248 = vld [vmem:[%s141 + $0x2f8] sm:$0xff]
        %v249 = vld [vmem:[%s141 + $0x300] sm:$0xff]
        %v250 = vld [vmem:[%s141 + $0x308] sm:$0xff]
        %v251 = vld [vmem:[%s141 + $0x310] sm:$0xff]
        %v252 = vld [vmem:[%s141 + $0x318] sm:$0xff]
        %v253 = vld [vmem:[%s141 + $0x320] sm:$0xff]
        %v254 = vld [vmem:[%s141 + $0x328] sm:$0xff]
        %v255 = vld [vmem:[%s141 + $0x330] sm:$0xff]
        %v256 = vld [vmem:[%s141 + $0x338] sm:$0xff]
        %v257 = vld [vmem:[%s141 + $0x340] sm:$0xff]
        %v258 = vld [vmem:[%s141 + $0x348] sm:$0xff]
        %v259 = vld [vmem:[%s141 + $0x350] sm:$0xff]
        %v260 = vld [vmem:[%s141 + $0x358] sm:$0xff]
        %v261 = vld [vmem:[%s141 + $0x360] sm:$0xff]
        %v262 = vld [vmem:[%s141 + $0x368] sm:$0xff]
        %v263 = vld [vmem:[%s141 + $0x370] sm:$0xff]
        %v264 = vld [vmem:[%s141 + $0x378] sm:$0xff]
        %v265 = vld [vmem:[%s141 + $0x380] sm:$0xff]
        %v266 = vld [vmem:[%s141 + $0x388] sm:$0xff]
        %v267 = vld [vmem:[%s141 + $0x390] sm:$0xff]
        %v268 = vld [vmem:[%s141 + $0x398] sm:$0xff]
        %v269 = vld [vmem:[%s141 + $0x3a0] sm:$0xff]
        %v270 = vld [vmem:[%s141 + $0x3a8] sm:$0xff]
        %v271 = vld [vmem:[%s141 + $0x3b0] sm:$0xff]
        %v272 = vld [vmem:[%s141 + $0x3b8] sm:$0xff]
        %v273 = vld [vmem:[%s141 + $0x3c0] sm:$0xff]
        %v274 = vld [vmem:[%s141 + $0x3c8] sm:$0xff]
        %v275 = vld [vmem:[%s141 + $0x3d0] sm:$0xff]
        %v276 = vld [vmem:[%s141 + $0x3d8] sm:$0xff]
        %v277 = vld [vmem:[%s141 + $0x3e0] sm:$0xff]
        %v278 = vld [vmem:[%s141 + $0x3e8] sm:$0xff]
        %v279 = vld [vmem:[%s141 + $0x3f0] sm:$0xff]
        %v280 = vld [vmem:[%s141 + $0x3f8] sm:$0xff]
        %v281 = vld [vmem:[%s141 + $0x400] sm:$0xff]
        %v282 = vld [vmem:[%s141 + $0x408] sm:$0xff]
        %v283 = vld [vmem:[%s141 + $0x410] sm:$0xff]
        %v284 = vld [vmem:[%s141 + $0x418] sm:$0xff]
        %v285 = vld [vmem:[%s141 + $0x420] sm:$0xff]
        %v286 = vld [vmem:[%s141 + $0x428] sm:$0xff]
        %v287 = vld [vmem:[%s141 + $0x430] sm:$0xff]
        %v288 = vld [vmem:[%s141 + $0x438] sm:$0xff]
        %v289 = vld [vmem:[%s141 + $0x440] sm:$0xff]
        %v290 = vld [vmem:[%s141 + $0x448] sm:$0xff]
        %v291 = vld [vmem:[%s141 + $0x450] sm:$0xff]
        %v292 = vld [vmem:[%s141 + $0x458] sm:$0xff]
        %v293 = vld [vmem:[%s141 + $0x460] sm:$0xff]
        %v294 = vld [vmem:[%s141 + $0x468] sm:$0xff]
        %v295 = vld [vmem:[%s141 + $0x470] sm:$0xff]
        %v296 = vld [vmem:[%s141 + $0x478] sm:$0xff]
        %v297 = vld [vmem:[%s141 + $0x480] sm:$0xff]
        %v298 = vld [vmem:[%s141 + $0x488] sm:$0xff]
        %v299 = vld [vmem:[%s141 + $0x490] sm:$0xff]
        %v300 = vld [vmem:[%s141 + $0x498] sm:$0xff]
        %v301 = vld [vmem:[%s141 + $0x4a0] sm:$0xff]
        %v302 = vld [vmem:[%s141 + $0x4a8] sm:$0xff]
        %v303 = vld [vmem:[%s141 + $0x4b0] sm:$0xff]
        %v304 = vld [vmem:[%s141 + $0x4b8] sm:$0xff]
        %v305 = vld [vmem:[%s141 + $0x4c0] sm:$0xff]
        %v306 = vld [vmem:[%s141 + $0x4c8] sm:$0xff]
        %v307 = vld [vmem:[%s141 + $0x4d0] sm:$0xff]
        %v308 = vld [vmem:[%s141 + $0x4d8] sm:$0xff]
        %v309 = vld [vmem:[%s141 + $0x4e0] sm:$0xff]
        %v310 = vld [vmem:[%s141 + $0x4e8] sm:$0xff]
        %v311 = vld [vmem:[%s141 + $0x4f0] sm:$0xff]
        %v312 = vld [vmem:[%s141 + $0x4f8] sm:$0xff]
        %v313 = vld [vmem:[%s141 + $0x500] sm:$0xff]
        %v314 = vld [vmem:[%s141 + $0x508] sm:$0xff]
        %v315 = vld [vmem:[%s141 + $0x510] sm:$0xff]
        %v316 = vld [vmem:[%s141 + $0x518] sm:$0xff]
        %v317 = vld [vmem:[%s141 + $0x520] sm:$0xff]
        %v318 = vld [vmem:[%s141 + $0x528] sm:$0xff]
        %v319 = vld [vmem:[%s141 + $0x530] sm:$0xff]
        %v320 = vld [vmem:[%s141 + $0x538] sm:$0xff]
        %v321 = vld [vmem:[%s141 + $0x540] sm:$0xff]
        %v322 = vld [vmem:[%s141 + $0x548] sm:$0xff]
        %v323 = vld [vmem:[%s141 + $0x550] sm:$0xff]
        %v324 = vld [vmem:[%s141 + $0x558] sm:$0xff]
        %v325 = vld [vmem:[%s141 + $0x560] sm:$0xff]
        %v326 = vld [vmem:[%s141 + $0x568] sm:$0xff]
        %v327 = vld [vmem:[%s141 + $0x570] sm:$0xff]
        %v328 = vld [vmem:[%s141 + $0x578] sm:$0xff]
        %v329 = vld [vmem:[%s141 + $0x580] sm:$0xff]
        %v330 = vld [vmem:[%s141 + $0x588] sm:$0xff]
        %v331 = vld [vmem:[%s141 + $0x590] sm:$0xff]
        %v332 = vld [vmem:[%s141 + $0x598] sm:$0xff]
        %v333 = vld [vmem:[%s141 + $0x5a0] sm:$0xff]
        %v334 = vld [vmem:[%s141 + $0x5a8] sm:$0xff]
        %v335 = vld [vmem:[%s141 + $0x5b0] sm:$0xff]
        %v336 = vld [vmem:[%s141 + $0x5b8] sm:$0xff]
        %v337 = vld [vmem:[%s141 + $0x5c0] sm:$0xff]
        %v338 = vld [vmem:[%s141 + $0x5c8] sm:$0xff]
        %v339 = vld [vmem:[%s141 + $0x5d0] sm:$0xff]
        %v340 = vld [vmem:[%s141 + $0x5d8] sm:$0xff]
        %v341 = vld [vmem:[%s141 + $0x5e0] sm:$0xff]
        %v342 = vld [vmem:[%s141 + $0x5e8] sm:$0xff]
        %v343 = vld [vmem:[%s141 + $0x5f0] sm:$0xff]
        %v344 = vld [vmem:[%s141 + $0x5f8] sm:$0xff]
        %v345 = vld [vmem:[%s141 + $0x600] sm:$0xff]
        %v346 = vld [vmem:[%s141 + $0x608] sm:$0xff]
        %v347 = vld [vmem:[%s141 + $0x610] sm:$0xff]
        %v348 = vld [vmem:[%s141 + $0x618] sm:$0xff]
        %v349 = vld [vmem:[%s141 + $0x620] sm:$0xff]
        %v350 = vld [vmem:[%s141 + $0x628] sm:$0xff]
        %v351 = vld [vmem:[%s141 + $0x630] sm:$0xff]
        %v352 = vld [vmem:[%s141 + $0x638] sm:$0xff]
        %v353 = vld [vmem:[%s141 + $0x640] sm:$0xff]
        %v354 = vld [vmem:[%s141 + $0x648] sm:$0xff]
        %v355 = vld [vmem:[%s141 + $0x650] sm:$0xff]
        %v356 = vld [vmem:[%s141 + $0x658] sm:$0xff]
        %v357 = vld [vmem:[%s141 + $0x660] sm:$0xff]
        %v358 = vld [vmem:[%s141 + $0x668] sm:$0xff]
        %v359 = vld [vmem:[%s141 + $0x670] sm:$0xff]
        %v360 = vld [vmem:[%s141 + $0x678] sm:$0xff]
        %v361 = vld [vmem:[%s141 + $0x680] sm:$0xff]
        %v362 = vld [vmem:[%s141 + $0x688] sm:$0xff]
        %v363 = vld [vmem:[%s141 + $0x690] sm:$0xff]
        %v364 = vld [vmem:[%s141 + $0x698] sm:$0xff]
        %v365 = vld [vmem:[%s141 + $0x6a0] sm:$0xff]
        %v366 = vld [vmem:[%s141 + $0x6a8] sm:$0xff]
        %v367 = vld [vmem:[%s141 + $0x6b0] sm:$0xff]
        %v368 = vld [vmem:[%s141 + $0x6b8] sm:$0xff]
        %v369 = vld [vmem:[%s141 + $0x6c0] sm:$0xff]
        %v370 = vld [vmem:[%s141 + $0x6c8] sm:$0xff]
        %v371 = vld [vmem:[%s141 + $0x6d0] sm:$0xff]
        %v372 = vld [vmem:[%s141 + $0x6d8] sm:$0xff]
        %v373 = vld [vmem:[%s141 + $0x6e0] sm:$0xff]
        %v374 = vld [vmem:[%s141 + $0x6e8] sm:$0xff]
        %v375 = vld [vmem:[%s141 + $0x6f0] sm:$0xff]
        %v376 = vld [vmem:[%s141 + $0x6f8] sm:$0xff]
        %v377 = vld [vmem:[%s141 + $0x700] sm:$0xff]
        %v378 = vld [vmem:[%s141 + $0x708] sm:$0xff]
        %v379 = vld [vmem:[%s141 + $0x710] sm:$0xff]
        %v380 = vld [vmem:[%s141 + $0x718] sm:$0xff]
        %v381 = vld [vmem:[%s141 + $0x720] sm:$0xff]
        %v382 = vld [vmem:[%s141 + $0x728] sm:$0xff]
        %v383 = vld [vmem:[%s141 + $0x730] sm:$0xff]
        %v384 = vld [vmem:[%s141 + $0x738] sm:$0xff]
        %v385 = vld [vmem:[%s141 + $0x740] sm:$0xff]
        %v386 = vld [vmem:[%s141 + $0x748] sm:$0xff]
        %v387 = vld [vmem:[%s141 + $0x750] sm:$0xff]
        %v388 = vld [vmem:[%s141 + $0x758] sm:$0xff]
        %v389 = vld [vmem:[%s141 + $0x760] sm:$0xff]
        %v390 = vld [vmem:[%s141 + $0x768] sm:$0xff]
        %v391 = vld [vmem:[%s141 + $0x770] sm:$0xff]
        %v392 = vld [vmem:[%s141 + $0x778] sm:$0xff]
        %v393 = vld [vmem:[%s141 + $0x780] sm:$0xff]
        %v394 = vld [vmem:[%s141 + $0x788] sm:$0xff]
        %v395 = vld [vmem:[%s141 + $0x790] sm:$0xff]
        %v396 = vld [vmem:[%s141 + $0x798] sm:$0xff]
        %v397 = vld [vmem:[%s141 + $0x7a0] sm:$0xff]
        %v398 = vld [vmem:[%s141 + $0x7a8] sm:$0xff]
        %v399 = vld [vmem:[%s141 + $0x7b0] sm:$0xff]
        %v400 = vld [vmem:[%s141 + $0x7b8] sm:$0xff]
        %v401 = vld [vmem:[%s141 + $0x7c0] sm:$0xff]
        %v402 = vld [vmem:[%s141 + $0x7c8] sm:$0xff]
        %v403 = vld [vmem:[%s141 + $0x7d0] sm:$0xff]
        %v404 = vld [vmem:[%s141 + $0x7d8] sm:$0xff]
        %v405 = vld [vmem:[%s141 + $0x7e0] sm:$0xff]
        %v406 = vld [vmem:[%s141 + $0x7e8] sm:$0xff]
        %v407 = vld [vmem:[%s141 + $0x7f0] sm:$0xff]
        %v408 = vld [vmem:[%s141 + $0x7f8] sm:$0xff]
        %v409 = vld [vmem:[%s141 + $0x800] sm:$0xff]
        %v410 = vld [vmem:[%s141 + $0x808] sm:$0xff]
        %v411 = vld [vmem:[%s141 + $0x810] sm:$0xff]
        %v412 = vld [vmem:[%s141 + $0x818] sm:$0xff]
        %v413 = vld [vmem:[%s141 + $0x820] sm:$0xff]
        %v414 = vld [vmem:[%s141 + $0x828] sm:$0xff]
        %v415 = vld [vmem:[%s141 + $0x830] sm:$0xff]
        %v416 = vld [vmem:[%s141 + $0x838] sm:$0xff]
        %v417 = vld [vmem:[%s141 + $0x840] sm:$0xff]
        %v418 = vld [vmem:[%s141 + $0x848] sm:$0xff]
        %v419 = vld [vmem:[%s141 + $0x850] sm:$0xff]
        %v420 = vld [vmem:[%s141 + $0x858] sm:$0xff]
        %v421 = vld [vmem:[%s141 + $0x860] sm:$0xff]
        %v422 = vld [vmem:[%s141 + $0x868] sm:$0xff]
        %v423 = vld [vmem:[%s141 + $0x870] sm:$0xff]
        %v424 = vld [vmem:[%s141 + $0x878] sm:$0xff]
        %v425 = vld [vmem:[%s141 + $0x880] sm:$0xff]
        %v426 = vld [vmem:[%s141 + $0x888] sm:$0xff]
        %v427 = vld [vmem:[%s141 + $0x890] sm:$0xff]
        %v428 = vld [vmem:[%s141 + $0x898] sm:$0xff]
        %v429 = vld [vmem:[%s141 + $0x8a0] sm:$0xff]
        %v430 = vld [vmem:[%s141 + $0x8a8] sm:$0xff]
        %v431 = vld [vmem:[%s141 + $0x8b0] sm:$0xff]
        %v432 = vld [vmem:[%s141 + $0x8b8] sm:$0xff]
        %v433 = vld [vmem:[%s141 + $0x8c0] sm:$0xff]
        %v434 = vld [vmem:[%s141 + $0x8c8] sm:$0xff]
        %v435 = vld [vmem:[%s141 + $0x8d0] sm:$0xff]
        %v436 = vld [vmem:[%s141 + $0x8d8] sm:$0xff]
        %v437 = vld [vmem:[%s141 + $0x8e0] sm:$0xff]
        %v438 = vld [vmem:[%s141 + $0x8e8] sm:$0xff]
        %v439 = vld [vmem:[%s141 + $0x8f0] sm:$0xff]
        %v440 = vld [vmem:[%s141 + $0x8f8] sm:$0xff]
        %v441 = vld [vmem:[%s141 + $0x900] sm:$0xff]
        %v442 = vld [vmem:[%s141 + $0x908] sm:$0xff]
        %v443 = vld [vmem:[%s141 + $0x910] sm:$0xff]
        %v444 = vld [vmem:[%s141 + $0x918] sm:$0xff]
        %v445 = vld [vmem:[%s141 + $0x920] sm:$0xff]
        %v446 = vld [vmem:[%s141 + $0x928] sm:$0xff]
        %v447 = vld [vmem:[%s141 + $0x930] sm:$0xff]
        %v448 = vld [vmem:[%s141 + $0x938] sm:$0xff]
        %v449 = vld [vmem:[%s141 + $0x940] sm:$0xff]
        %v450 = vld [vmem:[%s141 + $0x948] sm:$0xff]
        %v451 = vld [vmem:[%s141 + $0x950] sm:$0xff]
        %v452 = vld [vmem:[%s141 + $0x958] sm:$0xff]
        %v453 = vld [vmem:[%s141 + $0x960] sm:$0xff]
        %v454 = vld [vmem:[%s141 + $0x968] sm:$0xff]
        %v455 = vld [vmem:[%s141 + $0x970] sm:$0xff]
        %v456 = vld [vmem:[%s141 + $0x978] sm:$0xff]
        %v457 = vld [vmem:[%s141 + $0x980] sm:$0xff]
        %v458 = vld [vmem:[%s141 + $0x988] sm:$0xff]
        %v459 = vld [vmem:[%s141 + $0x990] sm:$0xff]
        %v460 = vld [vmem:[%s141 + $0x998] sm:$0xff]
        %v461 = vld [vmem:[%s141 + $0x9a0] sm:$0xff]
        %v462 = vld [vmem:[%s141 + $0x9a8] sm:$0xff]
        %v463 = vld [vmem:[%s141 + $0x9b0] sm:$0xff]
        %v464 = vld [vmem:[%s141 + $0x9b8] sm:$0xff]
        %v465 = vld [vmem:[%s141 + $0x9c0] sm:$0xff]
        %v466 = vld [vmem:[%s141 + $0x9c8] sm:$0xff]
        %v467 = vld [vmem:[%s141 + $0x9d0] sm:$0xff]
        %v468 = vld [vmem:[%s141 + $0x9d8] sm:$0xff]
        %v469 = vld [vmem:[%s141 + $0x9e0] sm:$0xff]
        %v470 = vld [vmem:[%s141 + $0x9e8] sm:$0xff]
        %v471 = vld [vmem:[%s141 + $0x9f0] sm:$0xff]
        %v472 = vld [vmem:[%s141 + $0x9f8] sm:$0xff]
        %v473 = vld [vmem:[%s141 + $0xa00] sm:$0xff]
        %v474 = vld [vmem:[%s141 + $0xa08] sm:$0xff]
        %v475 = vld [vmem:[%s141 + $0xa10] sm:$0xff]
        %v476 = vld [vmem:[%s141 + $0xa18] sm:$0xff]
        %v477 = vld [vmem:[%s141 + $0xa20] sm:$0xff]
        %v478 = vld [vmem:[%s141 + $0xa28] sm:$0xff]
        %v479 = vld [vmem:[%s141 + $0xa30] sm:$0xff]
        %v480 = vld [vmem:[%s141 + $0xa38] sm:$0xff]
        %v481 = vld [vmem:[%s141 + $0xa40] sm:$0xff]
        %v482 = vld [vmem:[%s141 + $0xa48] sm:$0xff]
        %v483 = vld [vmem:[%s141 + $0xa50] sm:$0xff]
        %v484 = vld [vmem:[%s141 + $0xa58] sm:$0xff]
        %v485 = vld [vmem:[%s141 + $0xa60] sm:$0xff]
        %v486 = vld [vmem:[%s141 + $0xa68] sm:$0xff]
        %v487 = vld [vmem:[%s141 + $0xa70] sm:$0xff]
        %v488 = vld [vmem:[%s141 + $0xa78] sm:$0xff]
        %v489 = vld [vmem:[%s141 + $0xa80] sm:$0xff]
        %v490 = vld [vmem:[%s141 + $0xa88] sm:$0xff]
        %v491 = vld [vmem:[%s141 + $0xa90] sm:$0xff]
        %v492 = vld [vmem:[%s141 + $0xa98] sm:$0xff]
        %v493 = vld [vmem:[%s141 + $0xaa0] sm:$0xff]
        %v494 = vld [vmem:[%s141 + $0xaa8] sm:$0xff]
        %v495 = vld [vmem:[%s141 + $0xab0] sm:$0xff]
        %v496 = vld [vmem:[%s141 + $0xab8] sm:$0xff]
        %v497 = vld [vmem:[%s141 + $0xac0] sm:$0xff]
        %v498 = vld [vmem:[%s141 + $0xac8] sm:$0xff]
        %v499 = vld [vmem:[%s141 + $0xad0] sm:$0xff]
        %v500 = vld [vmem:[%s141 + $0xad8] sm:$0xff]
        %v501 = vld [vmem:[%s141 + $0xae0] sm:$0xff]
        %v502 = vld [vmem:[%s141 + $0xae8] sm:$0xff]
        %v503 = vld [vmem:[%s141 + $0xaf0] sm:$0xff]
        %v504 = vld [vmem:[%s141 + $0xaf8] sm:$0xff]
        %v505 = vld [vmem:[%s141 + $0xb00] sm:$0xff]
        %v506 = vld [vmem:[%s141 + $0xb08] sm:$0xff]
        %v507 = vld [vmem:[%s141 + $0xb10] sm:$0xff]
        %v508 = vld [vmem:[%s141 + $0xb18] sm:$0xff]
        %v509 = vld [vmem:[%s141 + $0xb20] sm:$0xff]
        %v510 = vld [vmem:[%s141 + $0xb28] sm:$0xff]
        %v511 = vld [vmem:[%s141 + $0xb30] sm:$0xff]
        %v512 = vld [vmem:[%s141 + $0xb38] sm:$0xff]
        %v513 = vld [vmem:[%s141 + $0xb40] sm:$0xff]
        %v514 = vld [vmem:[%s141 + $0xb48] sm:$0xff]
        %v515 = vld [vmem:[%s141 + $0xb50] sm:$0xff]
        %v516 = vld [vmem:[%s141 + $0xb58] sm:$0xff]
        %v517 = vld [vmem:[%s141 + $0xb60] sm:$0xff]
        %v518 = vld [vmem:[%s141 + $0xb68] sm:$0xff]
        %v519 = vld [vmem:[%s141 + $0xb70] sm:$0xff]
        %v520 = vld [vmem:[%s141 + $0xb78] sm:$0xff]
        %v521 = vld [vmem:[%s141 + $0xb80] sm:$0xff]
        %v522 = vld [vmem:[%s141 + $0xb88] sm:$0xff]
        %v523 = vld [vmem:[%s141 + $0xb90] sm:$0xff]
        %v524 = vld [vmem:[%s141 + $0xb98] sm:$0xff]
        %v525 = vld [vmem:[%s141 + $0xba0] sm:$0xff]
        %v526 = vld [vmem:[%s141 + $0xba8] sm:$0xff]
        %v527 = vld [vmem:[%s141 + $0xbb0] sm:$0xff]
        %v528 = vld [vmem:[%s141 + $0xbb8] sm:$0xff]
        %v529 = vld [vmem:[%s141 + $0xbc0] sm:$0xff]
        %v530 = vld [vmem:[%s141 + $0xbc8] sm:$0xff]
        %v531 = vld [vmem:[%s141 + $0xbd0] sm:$0xff]
        %v532 = vld [vmem:[%s141 + $0xbd8] sm:$0xff]
        %v533 = vld [vmem:[%s141 + $0xbe0] sm:$0xff]
        %v534 = vld [vmem:[%s141 + $0xbe8] sm:$0xff]
        %v535 = vld [vmem:[%s141 + $0xbf0] sm:$0xff]
        %v536 = vld [vmem:[%s141 + $0xbf8] sm:$0xff]
        %v537 = vld [vmem:[%s141 + $0xc00] sm:$0xff]
        %v538 = vld [vmem:[%s141 + $0xc08] sm:$0xff]
        %v539 = vld [vmem:[%s141 + $0xc10] sm:$0xff]
        %v540 = vld [vmem:[%s141 + $0xc18] sm:$0xff]
        %v541 = vld [vmem:[%s141 + $0xc20] sm:$0xff]
        %v542 = vld [vmem:[%s141 + $0xc28] sm:$0xff]
        %v543 = vld [vmem:[%s141 + $0xc30] sm:$0xff]
        %v544 = vld [vmem:[%s141 + $0xc38] sm:$0xff]
        %v545 = vld [vmem:[%s141 + $0xc40] sm:$0xff]
        %v546 = vld [vmem:[%s141 + $0xc48] sm:$0xff]
        %v547 = vld [vmem:[%s141 + $0xc50] sm:$0xff]
        %v548 = vld [vmem:[%s141 + $0xc58] sm:$0xff]
        %v549 = vld [vmem:[%s141 + $0xc60] sm:$0xff]
        %v550 = vld [vmem:[%s141 + $0xc68] sm:$0xff]
        %v551 = vld [vmem:[%s141 + $0xc70] sm:$0xff]
        %v552 = vld [vmem:[%s141 + $0xc78] sm:$0xff]
        %v553 = vld [vmem:[%s141 + $0xc80] sm:$0xff]
        %v554 = vld [vmem:[%s141 + $0xc88] sm:$0xff]
        %v555 = vld [vmem:[%s141 + $0xc90] sm:$0xff]
        %v556 = vld [vmem:[%s141 + $0xc98] sm:$0xff]
        %v557 = vld [vmem:[%s141 + $0xca0] sm:$0xff]
        %v558 = vld [vmem:[%s141 + $0xca8] sm:$0xff]
        %v559 = vld [vmem:[%s141 + $0xcb0] sm:$0xff]
        %v560 = vld [vmem:[%s141 + $0xcb8] sm:$0xff]
        %v561 = vld [vmem:[%s141 + $0xcc0] sm:$0xff]
        %v562 = vld [vmem:[%s141 + $0xcc8] sm:$0xff]
        %v563 = vld [vmem:[%s141 + $0xcd0] sm:$0xff]
        %v564 = vld [vmem:[%s141 + $0xcd8] sm:$0xff]
        %v565 = vld [vmem:[%s141 + $0xce0] sm:$0xff]
        %v566 = vld [vmem:[%s141 + $0xce8] sm:$0xff]
        %v567 = vld [vmem:[%s141 + $0xcf0] sm:$0xff]
        %v568 = vld [vmem:[%s141 + $0xcf8] sm:$0xff]
        %v569 = vld [vmem:[%s141 + $0xd00] sm:$0xff]
        %v570 = vld [vmem:[%s141 + $0xd08] sm:$0xff]
        %v571 = vld [vmem:[%s141 + $0xd10] sm:$0xff]
        %v572 = vld [vmem:[%s141 + $0xd18] sm:$0xff]
        %v573 = vld [vmem:[%s141 + $0xd20] sm:$0xff]
        %v574 = vld [vmem:[%s141 + $0xd28] sm:$0xff]
        %v575 = vld [vmem:[%s141 + $0xd30] sm:$0xff]
        %v576 = vld [vmem:[%s141 + $0xd38] sm:$0xff]
        %v577 = vld [vmem:[%s141 + $0xd40] sm:$0xff]
        %v578 = vld [vmem:[%s141 + $0xd48] sm:$0xff]
        %v579 = vld [vmem:[%s141 + $0xd50] sm:$0xff]
        %v580 = vld [vmem:[%s141 + $0xd58] sm:$0xff]
        %v581 = vld [vmem:[%s141 + $0xd60] sm:$0xff]
        %v582 = vld [vmem:[%s141 + $0xd68] sm:$0xff]
        %v583 = vld [vmem:[%s141 + $0xd70] sm:$0xff]
        %v584 = vld [vmem:[%s141 + $0xd78] sm:$0xff]
        %v585 = vld [vmem:[%s141 + $0xd80] sm:$0xff]
        %v586 = vld [vmem:[%s141 + $0xd88] sm:$0xff]
        %v587 = vld [vmem:[%s141 + $0xd90] sm:$0xff]
        %v588 = vld [vmem:[%s141 + $0xd98] sm:$0xff]
        %v589 = vld [vmem:[%s141 + $0xda0] sm:$0xff]
        %v590 = vld [vmem:[%s141 + $0xda8] sm:$0xff]
        %v591 = vld [vmem:[%s141 + $0xdb0] sm:$0xff]
        %v592 = vld [vmem:[%s141 + $0xdb8] sm:$0xff]
        %v593 = vld [vmem:[%s141 + $0xdc0] sm:$0xff]
        %v594 = vld [vmem:[%s141 + $0xdc8] sm:$0xff]
        %v595 = vld [vmem:[%s141 + $0xdd0] sm:$0xff]
        %v596 = vld [vmem:[%s141 + $0xdd8] sm:$0xff]
        %v597 = vld [vmem:[%s141 + $0xde0] sm:$0xff]
        %v598 = vld [vmem:[%s141 + $0xde8] sm:$0xff]
        %v599 = vld [vmem:[%s141 + $0xdf0] sm:$0xff]
        %v600 = vld [vmem:[%s141 + $0xdf8] sm:$0xff]
        %v601 = vld [vmem:[%s141 + $0xe00] sm:$0xff]
        %v602 = vld [vmem:[%s141 + $0xe08] sm:$0xff]
        %v603 = vld [vmem:[%s141 + $0xe10] sm:$0xff]
        %v604 = vld [vmem:[%s141 + $0xe18] sm:$0xff]
        %v605 = vld [vmem:[%s141 + $0xe20] sm:$0xff]
        %v606 = vld [vmem:[%s141 + $0xe28] sm:$0xff]
        %v607 = vld [vmem:[%s141 + $0xe30] sm:$0xff]
        %v608 = vld [vmem:[%s141 + $0xe38] sm:$0xff]
        %v609 = vld [vmem:[%s141 + $0xe40] sm:$0xff]
        %v610 = vld [vmem:[%s141 + $0xe48] sm:$0xff]
        %v611 = vld [vmem:[%s141 + $0xe50] sm:$0xff]
        %v612 = vld [vmem:[%s141 + $0xe58] sm:$0xff]
        %v613 = vld [vmem:[%s141 + $0xe60] sm:$0xff]
        %v614 = vld [vmem:[%s141 + $0xe68] sm:$0xff]
        %v615 = vld [vmem:[%s141 + $0xe70] sm:$0xff]
        %v616 = vld [vmem:[%s141 + $0xe78] sm:$0xff]
        %v617 = vld [vmem:[%s141 + $0xe80] sm:$0xff]
        %v618 = vld [vmem:[%s141 + $0xe88] sm:$0xff]
        %v619 = vld [vmem:[%s141 + $0xe90] sm:$0xff]
        %v620 = vld [vmem:[%s141 + $0xe98] sm:$0xff]
        %v621 = vld [vmem:[%s141 + $0xea0] sm:$0xff]
        %v622 = vld [vmem:[%s141 + $0xea8] sm:$0xff]
        %v623 = vld [vmem:[%s141 + $0xeb0] sm:$0xff]
        %v624 = vld [vmem:[%s141 + $0xeb8] sm:$0xff]
        %v625 = vld [vmem:[%s141 + $0xec0] sm:$0xff]
        %v626 = vld [vmem:[%s141 + $0xec8] sm:$0xff]
        %v627 = vld [vmem:[%s141 + $0xed0] sm:$0xff]
        %v628 = vld [vmem:[%s141 + $0xed8] sm:$0xff]
        %v629 = vld [vmem:[%s141 + $0xee0] sm:$0xff]
        %v630 = vld [vmem:[%s141 + $0xee8] sm:$0xff]
        %v631 = vld [vmem:[%s141 + $0xef0] sm:$0xff]
        %v632 = vld [vmem:[%s141 + $0xef8] sm:$0xff]
        %v633 = vld [vmem:[%s141 + $0xf00] sm:$0xff]
        %v634 = vld [vmem:[%s141 + $0xf08] sm:$0xff]
        %v635 = vld [vmem:[%s141 + $0xf10] sm:$0xff]
        %v636 = vld [vmem:[%s141 + $0xf18] sm:$0xff]
        %v637 = vld [vmem:[%s141 + $0xf20] sm:$0xff]
        %v638 = vld [vmem:[%s141 + $0xf28] sm:$0xff]
        %v639 = vld [vmem:[%s141 + $0xf30] sm:$0xff]
        %v640 = vld [vmem:[%s141 + $0xf38] sm:$0xff]
        %v641 = vld [vmem:[%s141 + $0xf40] sm:$0xff]
        %v642 = vld [vmem:[%s141 + $0xf48] sm:$0xff]
        %v643 = vld [vmem:[%s141 + $0xf50] sm:$0xff]
        %v644 = vld [vmem:[%s141 + $0xf58] sm:$0xff]
        %v645 = vld [vmem:[%s141 + $0xf60] sm:$0xff]
        %v646 = vld [vmem:[%s141 + $0xf68] sm:$0xff]
        %v647 = vld [vmem:[%s141 + $0xf70] sm:$0xff]
        %v648 = vld [vmem:[%s141 + $0xf78] sm:$0xff]
        %v649 = vld [vmem:[%s141 + $0xf80] sm:$0xff]
        %v650 = vld [vmem:[%s141 + $0xf88] sm:$0xff]
        %v651 = vld [vmem:[%s141 + $0xf90] sm:$0xff]
        %v652 = vld [vmem:[%s141 + $0xf98] sm:$0xff]
        %v653 = vld [vmem:[%s141 + $0xfa0] sm:$0xff]
        %v654 = vld [vmem:[%s141 + $0xfa8] sm:$0xff]
        %v655 = vld [vmem:[%s141 + $0xfb0] sm:$0xff]
        %v656 = vld [vmem:[%s141 + $0xfb8] sm:$0xff]
        %v657 = vld [vmem:[%s141 + $0xfc0] sm:$0xff]
        %v658 = vld [vmem:[%s141 + $0xfc8] sm:$0xff]
        %v659 = vld [vmem:[%s141 + $0xfd0] sm:$0xff]
        %v660 = vld [vmem:[%s141 + $0xfd8] sm:$0xff]
        %v661 = vld [vmem:[%s141 + $0xfe0] sm:$0xff]
        %v662 = vld [vmem:[%s141 + $0xfe8] sm:$0xff]
        %v663 = vld [vmem:[%s141 + $0xff0] sm:$0xff]
        %v664 = vld [vmem:[%s141 + $0xff8] sm:$0xff]
        %v665 = vld [vmem:[%s141 + $0x1000] sm:$0xff]
        %v666 = vld [vmem:[%s141 + $0x1008] sm:$0xff]
        %v667 = vld [vmem:[%s141 + $0x1010] sm:$0xff]
        %v668 = vld [vmem:[%s141 + $0x1018] sm:$0xff]
        %v669 = vld [vmem:[%s141 + $0x1020] sm:$0xff]
        %v670 = vld [vmem:[%s141 + $0x1028] sm:$0xff]
        %v671 = vld [vmem:[%s141 + $0x1030] sm:$0xff]
        %v672 = vld [vmem:[%s141 + $0x1038] sm:$0xff]
        %v673 = vld [vmem:[%s141 + $0x1040] sm:$0xff]
        %v674 = vld [vmem:[%s141 + $0x1048] sm:$0xff]
        %v675 = vld [vmem:[%s141 + $0x1050] sm:$0xff]
        %v676 = vld [vmem:[%s141 + $0x1058] sm:$0xff]
        %v677 = vld [vmem:[%s141 + $0x1060] sm:$0xff]
        %v678 = vld [vmem:[%s141 + $0x1068] sm:$0xff]
        %v679 = vld [vmem:[%s141 + $0x1070] sm:$0xff]
        %v680 = vld [vmem:[%s141 + $0x1078] sm:$0xff]
        %v681 = vld [vmem:[%s141 + $0x1080] sm:$0xff]
        %v682 = vld [vmem:[%s141 + $0x1088] sm:$0xff]
        %v683 = vld [vmem:[%s141 + $0x1090] sm:$0xff]
        %v684 = vld [vmem:[%s141 + $0x1098] sm:$0xff]
        %v685 = vld [vmem:[%s141 + $0x10a0] sm:$0xff]
        %v686 = vld [vmem:[%s141 + $0x10a8] sm:$0xff]
        %v687 = vld [vmem:[%s141 + $0x10b0] sm:$0xff]
        %v688 = vld [vmem:[%s141 + $0x10b8] sm:$0xff]
        %v689 = vld [vmem:[%s141 + $0x10c0] sm:$0xff]
        %v690 = vld [vmem:[%s141 + $0x10c8] sm:$0xff]
        %v691 = vld [vmem:[%s141 + $0x10d0] sm:$0xff]
        %v692 = vld [vmem:[%s141 + $0x10d8] sm:$0xff]
        %v693 = vld [vmem:[%s141 + $0x10e0] sm:$0xff]
        %v694 = vld [vmem:[%s141 + $0x10e8] sm:$0xff]
        %v695 = vld [vmem:[%s141 + $0x10f0] sm:$0xff]
        %v696 = vld [vmem:[%s141 + $0x10f8] sm:$0xff]
        %v697 = vld [vmem:[%s141 + $0x1100] sm:$0xff]
        %v698 = vld [vmem:[%s141 + $0x1108] sm:$0xff]
        %v699 = vld [vmem:[%s141 + $0x1110] sm:$0xff]
        %v700 = vld [vmem:[%s141 + $0x1118] sm:$0xff]
        %v701 = vld [vmem:[%s141 + $0x1120] sm:$0xff]
        %v702 = vld [vmem:[%s141 + $0x1128] sm:$0xff]
        %v703 = vld [vmem:[%s141 + $0x1130] sm:$0xff]
        %v704 = vld [vmem:[%s141 + $0x1138] sm:$0xff]
        %v705 = vld [vmem:[%s141 + $0x1140] sm:$0xff]
        %v706 = vld [vmem:[%s141 + $0x1148] sm:$0xff]
        %v707 = vld [vmem:[%s141 + $0x1150] sm:$0xff]
        %v708 = vld [vmem:[%s141 + $0x1158] sm:$0xff]
        %v709 = vld [vmem:[%s141 + $0x1160] sm:$0xff]
        %v710 = vld [vmem:[%s141 + $0x1168] sm:$0xff]
        %v711 = vld [vmem:[%s141 + $0x1170] sm:$0xff]
        %v712 = vld [vmem:[%s141 + $0x1178] sm:$0xff]
        %v713 = vld [vmem:[%s141 + $0x1180] sm:$0xff]
        %v714 = vld [vmem:[%s141 + $0x1188] sm:$0xff]
        %v715 = vld [vmem:[%s141 + $0x1190] sm:$0xff]
        %v716 = vld [vmem:[%s141 + $0x1198] sm:$0xff]
        %v717 = vld [vmem:[%s141 + $0x11a0] sm:$0xff]
        %v718 = vld [vmem:[%s141 + $0x11a8] sm:$0xff]
        %v719 = vld [vmem:[%s141 + $0x11b0] sm:$0xff]
        %v720 = vld [vmem:[%s141 + $0x11b8] sm:$0xff]
        %v721 = vld [vmem:[%s141 + $0x11c0] sm:$0xff]
        %v722 = vld [vmem:[%s141 + $0x11c8] sm:$0xff]
        %v723 = vld [vmem:[%s141 + $0x11d0] sm:$0xff]
        %v724 = vld [vmem:[%s141 + $0x11d8] sm:$0xff]
        %v725 = vld [vmem:[%s141 + $0x11e0] sm:$0xff]
        %v726 = vld [vmem:[%s141 + $0x11e8] sm:$0xff]
        %v727 = vld [vmem:[%s141 + $0x11f0] sm:$0xff]
        %v728 = vld [vmem:[%s141 + $0x11f8] sm:$0xff]
        %v729 = vld [vmem:[%s141 + $0x1200] sm:$0xff]
        %v730 = vld [vmem:[%s141 + $0x1208] sm:$0xff]
        %v731 = vld [vmem:[%s141 + $0x1210] sm:$0xff]
        %v732 = vld [vmem:[%s141 + $0x1218] sm:$0xff]
        %v733 = vld [vmem:[%s141 + $0x1220] sm:$0xff]
        %v734 = vld [vmem:[%s141 + $0x1228] sm:$0xff]
        %v735 = vld [vmem:[%s141 + $0x1230] sm:$0xff]
        %v736 = vld [vmem:[%s141 + $0x1238] sm:$0xff]
        %v737 = vld [vmem:[%s141 + $0x1240] sm:$0xff]
        %v738 = vld [vmem:[%s141 + $0x1248] sm:$0xff]
        %v739 = vld [vmem:[%s141 + $0x1250] sm:$0xff]
        %v740 = vld [vmem:[%s141 + $0x1258] sm:$0xff]
        %v741 = vld [vmem:[%s141 + $0x1260] sm:$0xff]
        %v742 = vld [vmem:[%s141 + $0x1268] sm:$0xff]
        %v743 = vld [vmem:[%s141 + $0x1270] sm:$0xff]
        %v744 = vld [vmem:[%s141 + $0x1278] sm:$0xff]
        %v745 = vld [vmem:[%s141 + $0x1280] sm:$0xff]
        %v746 = vld [vmem:[%s141 + $0x1288] sm:$0xff]
        %v747 = vld [vmem:[%s141 + $0x1290] sm:$0xff]
        %v748 = vld [vmem:[%s141 + $0x1298] sm:$0xff]
        %v749 = vld [vmem:[%s141 + $0x12a0] sm:$0xff]
        %v750 = vld [vmem:[%s141 + $0x12a8] sm:$0xff]
        %v751 = vld [vmem:[%s141 + $0x12b0] sm:$0xff]
        %v752 = vld [vmem:[%s141 + $0x12b8] sm:$0xff]
        %v753 = vld [vmem:[%s141 + $0x12c0] sm:$0xff]
        %v754 = vld [vmem:[%s141 + $0x12c8] sm:$0xff]
        %v755 = vld [vmem:[%s141 + $0x12d0] sm:$0xff]
        %v756 = vld [vmem:[%s141 + $0x12d8] sm:$0xff]
        %v757 = vld [vmem:[%s141 + $0x12e0] sm:$0xff]
        %v758 = vld [vmem:[%s141 + $0x12e8] sm:$0xff]
        %v759 = vld [vmem:[%s141 + $0x12f0] sm:$0xff]
        %v760 = vld [vmem:[%s141 + $0x12f8] sm:$0xff]
        %v761 = vld [vmem:[%s141 + $0x1300] sm:$0xff]
        %v762 = vld [vmem:[%s141 + $0x1308] sm:$0xff]
        %v763 = vld [vmem:[%s141 + $0x1310] sm:$0xff]
        %v764 = vld [vmem:[%s141 + $0x1318] sm:$0xff]
        %v765 = vld [vmem:[%s141 + $0x1320] sm:$0xff]
        %v766 = vld [vmem:[%s141 + $0x1328] sm:$0xff]
        %v767 = vld [vmem:[%s141 + $0x1330] sm:$0xff]
        %v768 = vld [vmem:[%s141 + $0x1338] sm:$0xff]
        %v769 = vld [vmem:[%s141 + $0x1340] sm:$0xff]
        %v770 = vld [vmem:[%s141 + $0x1348] sm:$0xff]
        %v771 = vld [vmem:[%s141 + $0x1350] sm:$0xff]
        %v772 = vld [vmem:[%s141 + $0x1358] sm:$0xff]
        %v773 = vld [vmem:[%s141 + $0x1360] sm:$0xff]
        %v774 = vld [vmem:[%s141 + $0x1368] sm:$0xff]
        %v775 = vld [vmem:[%s141 + $0x1370] sm:$0xff]
        %v776 = vld [vmem:[%s141 + $0x1378] sm:$0xff]
        %v777 = vld [vmem:[%s141 + $0x1380] sm:$0xff]
        %v778 = vld [vmem:[%s141 + $0x1388] sm:$0xff]
        %v779 = vld [vmem:[%s141 + $0x1390] sm:$0xff]
        %v780 = vld [vmem:[%s141 + $0x1398] sm:$0xff]
        %v781 = vld [vmem:[%s141 + $0x13a0] sm:$0xff]
        %v782 = vld [vmem:[%s141 + $0x13a8] sm:$0xff]
        %v783 = vld [vmem:[%s141 + $0x13b0] sm:$0xff]
        %v784 = vld [vmem:[%s141 + $0x13b8] sm:$0xff]
        %v785 = vld [vmem:[%s141 + $0x13c0] sm:$0xff]
        %v786 = vld [vmem:[%s141 + $0x13c8] sm:$0xff]
        %v787 = vld [vmem:[%s141 + $0x13d0] sm:$0xff]
        %v788 = vld [vmem:[%s141 + $0x13d8] sm:$0xff]
        %v789 = vld [vmem:[%s141 + $0x13e0] sm:$0xff]
        %v790 = vld [vmem:[%s141 + $0x13e8] sm:$0xff]
        %v791 = vld [vmem:[%s141 + $0x13f0] sm:$0xff]
        %v792 = vld [vmem:[%s141 + $0x13f8] sm:$0xff]
        %v793 = vld [vmem:[%s141 + $0x1400] sm:$0xff]
        %v794 = vld [vmem:[%s141 + $0x1408] sm:$0xff]
        %v795 = vld [vmem:[%s141 + $0x1410] sm:$0xff]
        %v796 = vld [vmem:[%s141 + $0x1418] sm:$0xff]
        %v797 = vld [vmem:[%s141 + $0x1420] sm:$0xff]
        %v798 = vld [vmem:[%s141 + $0x1428] sm:$0xff]
        %v799 = vld [vmem:[%s141 + $0x1430] sm:$0xff]
        %v800 = vld [vmem:[%s141 + $0x1438] sm:$0xff]
        %v801 = vld [vmem:[%s141 + $0x1440] sm:$0xff]
        %v802 = vld [vmem:[%s141 + $0x1448] sm:$0xff]
        %v803 = vld [vmem:[%s141 + $0x1450] sm:$0xff]
        %v804 = vld [vmem:[%s141 + $0x1458] sm:$0xff]
        %v805 = vld [vmem:[%s141 + $0x1460] sm:$0xff]
        %v806 = vld [vmem:[%s141 + $0x1468] sm:$0xff]
        %v807 = vld [vmem:[%s141 + $0x1470] sm:$0xff]
        %v808 = vld [vmem:[%s141 + $0x1478] sm:$0xff]
        %v809 = vld [vmem:[%s141 + $0x1480] sm:$0xff]
        %v810 = vld [vmem:[%s141 + $0x1488] sm:$0xff]
        %v811 = vld [vmem:[%s141 + $0x1490] sm:$0xff]
        %v812 = vld [vmem:[%s141 + $0x1498] sm:$0xff]
        %v813 = vld [vmem:[%s141 + $0x14a0] sm:$0xff]
        %v814 = vld [vmem:[%s141 + $0x14a8] sm:$0xff]
        %v815 = vld [vmem:[%s141 + $0x14b0] sm:$0xff]
        %v816 = vld [vmem:[%s141 + $0x14b8] sm:$0xff]
        %v817 = vld [vmem:[%s141 + $0x14c0] sm:$0xff]
        %v818 = vld [vmem:[%s141 + $0x14c8] sm:$0xff]
        %v819 = vld [vmem:[%s141 + $0x14d0] sm:$0xff]
        %v820 = vld [vmem:[%s141 + $0x14d8] sm:$0xff]
        %v821 = vld [vmem:[%s141 + $0x14e0] sm:$0xff]
        %v822 = vld [vmem:[%s141 + $0x14e8] sm:$0xff]
        %v823 = vld [vmem:[%s141 + $0x14f0] sm:$0xff]
        %v824 = vld [vmem:[%s141 + $0x14f8] sm:$0xff]
        %v825 = vld [vmem:[%s141 + $0x1500] sm:$0xff]
        %v826 = vld [vmem:[%s141 + $0x1508] sm:$0xff]
        %v827 = vld [vmem:[%s141 + $0x1510] sm:$0xff]
        %v828 = vld [vmem:[%s141 + $0x1518] sm:$0xff]
        %v829 = vld [vmem:[%s141 + $0x1520] sm:$0xff]
        %v830 = vld [vmem:[%s141 + $0x1528] sm:$0xff]
        %v831 = vld [vmem:[%s141 + $0x1530] sm:$0xff]
        %v832 = vld [vmem:[%s141 + $0x1538] sm:$0xff]
        %v833 = vld [vmem:[%s141 + $0x1540] sm:$0xff]
        %v834 = vld [vmem:[%s141 + $0x1548] sm:$0xff]
        %v835 = vld [vmem:[%s141 + $0x1550] sm:$0xff]
        %v836 = vld [vmem:[%s141 + $0x1558] sm:$0xff]
        %v837 = vld [vmem:[%s141 + $0x1560] sm:$0xf]
        %v838 = vld [vmem:[%s141 + $0x1568] sm:$0xf]
        %v839 = vld [vmem:[%s141 + $0x1570] sm:$0xf]
        %v840 = vld [vmem:[%s141 + $0x1578] sm:$0xf]
        %vm841 = vcmask 752640
        %v843 = vsel %vm841, %v152, 0
        %vm845 = vcmask 1043456
        %v847 = vsel %vm845, %v837, 0
        %v850 = vsel %vm845, %v838, 0
        %v853 = vsel %vm845, %v839, 0
        %v856 = vsel %vm845, %v840, 0
        %858 = vmatprep.subr.mxu0 %v214
        %859 = vmatpush1.msra.mxu0 %v213
        %860 = vmatprep.subr.mxu0 %v210
        %861 = vmatpush1.msra.mxu0 %v209
        %862 = vmatprep.subr.mxu0 %v206
        %863 = vmatpush1.msra.mxu0 %v205
        %864 = vmatprep.subr.mxu0 %v202
        %865 = vmatpush1.msra.mxu0 %v201
        %866 = vmatprep.subr.mxu0 %v198
        %867 = vmatpush1.msra.mxu0 %v197
        %868 = vmatprep.subr.mxu0 %v194
        %869 = vmatpush1.msra.mxu0 %v193
        %870 = vmatprep.subr.mxu0 %v190
        %871 = vmatpush1.msra.mxu0 %v189
        %872 = vmatprep.subr.mxu0 %v186
        %873 = vmatpush1.msra.mxu0 %v185
        %874 = vmatprep.subr.mxu0 %v182
        %875 = vmatpush1.msra.mxu0 %v181
        %876 = vmatprep.subr.mxu0 %v178
        %877 = vmatpush1.msra.mxu0 %v177
        %878 = vmatprep.subr.mxu0 %v174
        %879 = vmatpush1.msra.mxu0 %v173
        %880 = vmatprep.subr.mxu0 %v170
        %881 = vmatpush1.msra.mxu0 %v169
        %882 = vmatprep.subr.mxu0 %v166
        %883 = vmatpush1.msra.mxu0 %v165
        %884 = vmatprep.subr.mxu0 %v162
        %885 = vmatpush1.msra.mxu0 %v161
        %886 = vmatprep.subr.mxu0 %v158
        %887 = vmatpush1.msra.mxu0 %v157
        %888 = vmatprep.subr.mxu0 %v154
        %889 = vmatpush1.msra.mxu0 %v153
        %890 = vmatprep.subr.mxu0 %v278
        %891 = vmatpush2.msra.mxu0 %v277
        %892 = vmatprep.subr.mxu0 %v274
        %893 = vmatpush2.msra.mxu0 %v273
        %894 = vmatprep.subr.mxu0 %v270
        %895 = vmatpush2.msra.mxu0 %v269
        %896 = vmatprep.subr.mxu0 %v266
        %897 = vmatpush2.msra.mxu0 %v265
        %898 = vmatprep.subr.mxu0 %v262
        %899 = vmatpush2.msra.mxu0 %v261
        %900 = vmatprep.subr.mxu0 %v258
        %901 = vmatpush2.msra.mxu0 %v257
        %902 = vmatprep.subr.mxu0 %v254
        %903 = vmatpush2.msra.mxu0 %v253
        %904 = vmatprep.subr.mxu0 %v250
        %905 = vmatpush2.msra.mxu0 %v249
        %906 = vmatprep.subr.mxu0 %v246
        %907 = vmatpush2.msra.mxu0 %v245
        %908 = vmatprep.subr.mxu0 %v242
        %909 = vmatpush2.msra.mxu0 %v241
        %910 = vmatprep.subr.mxu0 %v238
        %911 = vmatpush2.msra.mxu0 %v237
        %912 = vmatprep.subr.mxu0 %v234
        %913 = vmatpush2.msra.mxu0 %v233
        %914 = vmatprep.subr.mxu0 %v230
        %915 = vmatpush2.msra.mxu0 %v229
        %916 = vmatprep.subr.mxu0 %v226
        %917 = vmatpush2.msra.mxu0 %v225
        %918 = vmatprep.subr.mxu0 %v222
        %919 = vmatpush2.msra.mxu0 %v221
        %920 = vmatprep.subr.mxu0 %v218
        %921 = vmatpush2.msra.mxu0 %v217
        %922 = vmatprep.mubr.f32.mxu0 %v143
        %923 = vmatmul.mubr.f32.gmra.mxu0 %v142
        %v924 = vpop.f32.mrf.mxu0
        %v925 = vadd.f32 0.0, %v924
        %v926 = vpop.f32.mrf.mxu0
        %v927 = vadd.f32 0.0, %v926
        %928 = vdwg.mxu0
        %929 = vmatprep.subr.mxu0 %v342
        %930 = vmatpush1.msra.mxu0 %v341
        %931 = vmatprep.subr.mxu0 %v338
        %932 = vmatpush1.msra.mxu0 %v337
        %933 = vmatprep.subr.mxu0 %v334
        %934 = vmatpush1.msra.mxu0 %v333
        %935 = vmatprep.subr.mxu0 %v330
        %936 = vmatpush1.msra.mxu0 %v329
        %937 = vmatprep.subr.mxu0 %v326
        %938 = vmatpush1.msra.mxu0 %v325
        %939 = vmatprep.subr.mxu0 %v322
        %940 = vmatpush1.msra.mxu0 %v321
        %941 = vmatprep.subr.mxu0 %v318
        %942 = vmatpush1.msra.mxu0 %v317
        %943 = vmatprep.subr.mxu0 %v314
        %944 = vmatpush1.msra.mxu0 %v313
        %945 = vmatprep.subr.mxu0 %v310
        %946 = vmatpush1.msra.mxu0 %v309
        %947 = vmatprep.subr.mxu0 %v306
        %948 = vmatpush1.msra.mxu0 %v305
        %949 = vmatprep.subr.mxu0 %v302
        %950 = vmatpush1.msra.mxu0 %v301
        %951 = vmatprep.subr.mxu0 %v298
        %952 = vmatpush1.msra.mxu0 %v297
        %953 = vmatprep.subr.mxu0 %v294
        %954 = vmatpush1.msra.mxu0 %v293
        %955 = vmatprep.subr.mxu0 %v290
        %956 = vmatpush1.msra.mxu0 %v289
        %957 = vmatprep.subr.mxu0 %v286
        %958 = vmatpush1.msra.mxu0 %v285
        %959 = vmatprep.subr.mxu0 %v282
        %960 = vmatpush1.msra.mxu0 %v281
        %961 = vmatprep.subr.mxu0 %v406
        %962 = vmatpush2.msra.mxu0 %v405
        %963 = vmatprep.subr.mxu0 %v402
        %964 = vmatpush2.msra.mxu0 %v401
        %965 = vmatprep.subr.mxu0 %v398
        %966 = vmatpush2.msra.mxu0 %v397
        %967 = vmatprep.subr.mxu0 %v394
        %968 = vmatpush2.msra.mxu0 %v393
        %969 = vmatprep.subr.mxu0 %v390
        %970 = vmatpush2.msra.mxu0 %v389
        %971 = vmatprep.subr.mxu0 %v386
        %972 = vmatpush2.msra.mxu0 %v385
        %973 = vmatprep.subr.mxu0 %v382
        %974 = vmatpush2.msra.mxu0 %v381
        %975 = vmatprep.subr.mxu0 %v378
        %976 = vmatpush2.msra.mxu0 %v377
        %977 = vmatprep.subr.mxu0 %v374
        %978 = vmatpush2.msra.mxu0 %v373
        %979 = vmatprep.subr.mxu0 %v370
        %980 = vmatpush2.msra.mxu0 %v369
        %981 = vmatprep.subr.mxu0 %v366
        %982 = vmatpush2.msra.mxu0 %v365
        %983 = vmatprep.subr.mxu0 %v362
        %984 = vmatpush2.msra.mxu0 %v361
        %985 = vmatprep.subr.mxu0 %v358
        %986 = vmatpush2.msra.mxu0 %v357
        %987 = vmatprep.subr.mxu0 %v354
        %988 = vmatpush2.msra.mxu0 %v353
        %989 = vmatprep.subr.mxu0 %v350
        %990 = vmatpush2.msra.mxu0 %v349
        %991 = vmatprep.subr.mxu0 %v346
        %992 = vmatpush2.msra.mxu0 %v345
        %993 = vmatprep.mubr.f32.mxu0 %v145
        %994 = vmatmul.mubr.f32.gmra.mxu0 %v144
        %v995 = vpop.f32.mrf.mxu0
        %v996 = vadd.f32 %v925, %v995
        %v997 = vpop.f32.mrf.mxu0
        %v998 = vadd.f32 %v927, %v997
        %999 = vdwg.mxu0
        %1000 = vmatprep.subr.mxu0 %v470
        %1001 = vmatpush1.msra.mxu0 %v469
        %1002 = vmatprep.subr.mxu0 %v466
        %1003 = vmatpush1.msra.mxu0 %v465
        %1004 = vmatprep.subr.mxu0 %v462
        %1005 = vmatpush1.msra.mxu0 %v461
        %1006 = vmatprep.subr.mxu0 %v458
        %1007 = vmatpush1.msra.mxu0 %v457
        %1008 = vmatprep.subr.mxu0 %v454
        %1009 = vmatpush1.msra.mxu0 %v453
        %1010 = vmatprep.subr.mxu0 %v450
        %1011 = vmatpush1.msra.mxu0 %v449
        %1012 = vmatprep.subr.mxu0 %v446
        %1013 = vmatpush1.msra.mxu0 %v445
        %1014 = vmatprep.subr.mxu0 %v442
        %1015 = vmatpush1.msra.mxu0 %v441
        %1016 = vmatprep.subr.mxu0 %v438
        %1017 = vmatpush1.msra.mxu0 %v437
        %1018 = vmatprep.subr.mxu0 %v434
        %1019 = vmatpush1.msra.mxu0 %v433
        %1020 = vmatprep.subr.mxu0 %v430
        %1021 = vmatpush1.msra.mxu0 %v429
        %1022 = vmatprep.subr.mxu0 %v426
        %1023 = vmatpush1.msra.mxu0 %v425
        %1024 = vmatprep.subr.mxu0 %v422
        %1025 = vmatpush1.msra.mxu0 %v421
        %1026 = vmatprep.subr.mxu0 %v418
        %1027 = vmatpush1.msra.mxu0 %v417
        %1028 = vmatprep.subr.mxu0 %v414
        %1029 = vmatpush1.msra.mxu0 %v413
        %1030 = vmatprep.subr.mxu0 %v410
        %1031 = vmatpush1.msra.mxu0 %v409
        %1032 = vmatprep.subr.mxu0 %v534
        %1033 = vmatpush2.msra.mxu0 %v533
        %1034 = vmatprep.subr.mxu0 %v530
        %1035 = vmatpush2.msra.mxu0 %v529
        %1036 = vmatprep.subr.mxu0 %v526
        %1037 = vmatpush2.msra.mxu0 %v525
        %1038 = vmatprep.subr.mxu0 %v522
        %1039 = vmatpush2.msra.mxu0 %v521
        %1040 = vmatprep.subr.mxu0 %v518
        %1041 = vmatpush2.msra.mxu0 %v517
        %1042 = vmatprep.subr.mxu0 %v514
        %1043 = vmatpush2.msra.mxu0 %v513
        %1044 = vmatprep.subr.mxu0 %v510
        %1045 = vmatpush2.msra.mxu0 %v509
        %1046 = vmatprep.subr.mxu0 %v506
        %1047 = vmatpush2.msra.mxu0 %v505
        %1048 = vmatprep.subr.mxu0 %v502
        %1049 = vmatpush2.msra.mxu0 %v501
        %1050 = vmatprep.subr.mxu0 %v498
        %1051 = vmatpush2.msra.mxu0 %v497
        %1052 = vmatprep.subr.mxu0 %v494
        %1053 = vmatpush2.msra.mxu0 %v493
        %1054 = vmatprep.subr.mxu0 %v490
        %1055 = vmatpush2.msra.mxu0 %v489
        %1056 = vmatprep.subr.mxu0 %v486
        %1057 = vmatpush2.msra.mxu0 %v485
        %1058 = vmatprep.subr.mxu0 %v482
        %1059 = vmatpush2.msra.mxu0 %v481
        %1060 = vmatprep.subr.mxu0 %v478
        %1061 = vmatpush2.msra.mxu0 %v477
        %1062 = vmatprep.subr.mxu0 %v474
        %1063 = vmatpush2.msra.mxu0 %v473
        %1064 = vmatprep.mubr.f32.mxu0 %v147
        %1065 = vmatmul.mubr.f32.gmra.mxu0 %v146
        %v1066 = vpop.f32.mrf.mxu0
        %v1067 = vadd.f32 %v996, %v1066
        %v1068 = vpop.f32.mrf.mxu0
        %v1069 = vadd.f32 %v998, %v1068
        %1070 = vdwg.mxu0
        %1071 = vmatprep.subr.mxu0 %v598
        %1072 = vmatpush1.msra.mxu0 %v597
        %1073 = vmatprep.subr.mxu0 %v594
        %1074 = vmatpush1.msra.mxu0 %v593
        %1075 = vmatprep.subr.mxu0 %v590
        %1076 = vmatpush1.msra.mxu0 %v589
        %1077 = vmatprep.subr.mxu0 %v586
        %1078 = vmatpush1.msra.mxu0 %v585
        %1079 = vmatprep.subr.mxu0 %v582
        %1080 = vmatpush1.msra.mxu0 %v581
        %1081 = vmatprep.subr.mxu0 %v578
        %1082 = vmatpush1.msra.mxu0 %v577
        %1083 = vmatprep.subr.mxu0 %v574
        %1084 = vmatpush1.msra.mxu0 %v573
        %1085 = vmatprep.subr.mxu0 %v570
        %1086 = vmatpush1.msra.mxu0 %v569
        %1087 = vmatprep.subr.mxu0 %v566
        %1088 = vmatpush1.msra.mxu0 %v565
        %1089 = vmatprep.subr.mxu0 %v562
        %1090 = vmatpush1.msra.mxu0 %v561
        %1091 = vmatprep.subr.mxu0 %v558
        %1092 = vmatpush1.msra.mxu0 %v557
        %1093 = vmatprep.subr.mxu0 %v554
        %1094 = vmatpush1.msra.mxu0 %v553
        %1095 = vmatprep.subr.mxu0 %v550
        %1096 = vmatpush1.msra.mxu0 %v549
        %1097 = vmatprep.subr.mxu0 %v546
        %1098 = vmatpush1.msra.mxu0 %v545
        %1099 = vmatprep.subr.mxu0 %v542
        %1100 = vmatpush1.msra.mxu0 %v541
        %1101 = vmatprep.subr.mxu0 %v538
        %1102 = vmatpush1.msra.mxu0 %v537
        %1103 = vmatprep.subr.mxu0 %v662
        %1104 = vmatpush2.msra.mxu0 %v661
        %1105 = vmatprep.subr.mxu0 %v658
        %1106 = vmatpush2.msra.mxu0 %v657
        %1107 = vmatprep.subr.mxu0 %v654
        %1108 = vmatpush2.msra.mxu0 %v653
        %1109 = vmatprep.subr.mxu0 %v650
        %1110 = vmatpush2.msra.mxu0 %v649
        %1111 = vmatprep.subr.mxu0 %v646
        %1112 = vmatpush2.msra.mxu0 %v645
        %1113 = vmatprep.subr.mxu0 %v642
        %1114 = vmatpush2.msra.mxu0 %v641
        %1115 = vmatprep.subr.mxu0 %v638
        %1116 = vmatpush2.msra.mxu0 %v637
        %1117 = vmatprep.subr.mxu0 %v634
        %1118 = vmatpush2.msra.mxu0 %v633
        %1119 = vmatprep.subr.mxu0 %v630
        %1120 = vmatpush2.msra.mxu0 %v629
        %1121 = vmatprep.subr.mxu0 %v626
        %1122 = vmatpush2.msra.mxu0 %v625
        %1123 = vmatprep.subr.mxu0 %v622
        %1124 = vmatpush2.msra.mxu0 %v621
        %1125 = vmatprep.subr.mxu0 %v618
        %1126 = vmatpush2.msra.mxu0 %v617
        %1127 = vmatprep.subr.mxu0 %v614
        %1128 = vmatpush2.msra.mxu0 %v613
        %1129 = vmatprep.subr.mxu0 %v610
        %1130 = vmatpush2.msra.mxu0 %v609
        %1131 = vmatprep.subr.mxu0 %v606
        %1132 = vmatpush2.msra.mxu0 %v605
        %1133 = vmatprep.subr.mxu0 %v602
        %1134 = vmatpush2.msra.mxu0 %v601
        %1135 = vmatprep.mubr.f32.mxu0 %v149
        %1136 = vmatmul.mubr.f32.gmra.mxu0 %v148
        %v1137 = vpop.f32.mrf.mxu0
        %v1138 = vadd.f32 %v1067, %v1137
        %v1139 = vpop.f32.mrf.mxu0
        %v1140 = vadd.f32 %v1069, %v1139
        %1141 = vdwg.mxu0
        %1142 = vmatprep.subr.mxu0 %v726
        %1143 = vmatpush1.msra.mxu0 %v725
        %1144 = vmatprep.subr.mxu0 %v722
        %1145 = vmatpush1.msra.mxu0 %v721
        %1146 = vmatprep.subr.mxu0 %v718
        %1147 = vmatpush1.msra.mxu0 %v717
        %1148 = vmatprep.subr.mxu0 %v714
        %1149 = vmatpush1.msra.mxu0 %v713
        %1150 = vmatprep.subr.mxu0 %v710
        %1151 = vmatpush1.msra.mxu0 %v709
        %1152 = vmatprep.subr.mxu0 %v706
        %1153 = vmatpush1.msra.mxu0 %v705
        %1154 = vmatprep.subr.mxu0 %v702
        %1155 = vmatpush1.msra.mxu0 %v701
        %1156 = vmatprep.subr.mxu0 %v698
        %1157 = vmatpush1.msra.mxu0 %v697
        %1158 = vmatprep.subr.mxu0 %v694
        %1159 = vmatpush1.msra.mxu0 %v693
        %1160 = vmatprep.subr.mxu0 %v690
        %1161 = vmatpush1.msra.mxu0 %v689
        %1162 = vmatprep.subr.mxu0 %v686
        %1163 = vmatpush1.msra.mxu0 %v685
        %1164 = vmatprep.subr.mxu0 %v682
        %1165 = vmatpush1.msra.mxu0 %v681
        %1166 = vmatprep.subr.mxu0 %v678
        %1167 = vmatpush1.msra.mxu0 %v677
        %1168 = vmatprep.subr.mxu0 %v674
        %1169 = vmatpush1.msra.mxu0 %v673
        %1170 = vmatprep.subr.mxu0 %v670
        %1171 = vmatpush1.msra.mxu0 %v669
        %1172 = vmatprep.subr.mxu0 %v666
        %1173 = vmatpush1.msra.mxu0 %v665
        %1174 = vmatprep.subr.mxu0 %v790
        %1175 = vmatpush2.msra.mxu0 %v789
        %1176 = vmatprep.subr.mxu0 %v786
        %1177 = vmatpush2.msra.mxu0 %v785
        %1178 = vmatprep.subr.mxu0 %v782
        %1179 = vmatpush2.msra.mxu0 %v781
        %1180 = vmatprep.subr.mxu0 %v778
        %1181 = vmatpush2.msra.mxu0 %v777
        %1182 = vmatprep.subr.mxu0 %v774
        %1183 = vmatpush2.msra.mxu0 %v773
        %1184 = vmatprep.subr.mxu0 %v770
        %1185 = vmatpush2.msra.mxu0 %v769
        %1186 = vmatprep.subr.mxu0 %v766
        %1187 = vmatpush2.msra.mxu0 %v765
        %1188 = vmatprep.subr.mxu0 %v762
        %1189 = vmatpush2.msra.mxu0 %v761
        %1190 = vmatprep.subr.mxu0 %v758
        %1191 = vmatpush2.msra.mxu0 %v757
        %1192 = vmatprep.subr.mxu0 %v754
        %1193 = vmatpush2.msra.mxu0 %v753
        %1194 = vmatprep.subr.mxu0 %v750
        %1195 = vmatpush2.msra.mxu0 %v749
        %1196 = vmatprep.subr.mxu0 %v746
        %1197 = vmatpush2.msra.mxu0 %v745
        %1198 = vmatprep.subr.mxu0 %v742
        %1199 = vmatpush2.msra.mxu0 %v741
        %1200 = vmatprep.subr.mxu0 %v738
        %1201 = vmatpush2.msra.mxu0 %v737
        %1202 = vmatprep.subr.mxu0 %v734
        %1203 = vmatpush2.msra.mxu0 %v733
        %1204 = vmatprep.subr.mxu0 %v730
        %1205 = vmatpush2.msra.mxu0 %v729
        %1206 = vmatprep.mubr.f32.mxu0 %v151
        %1207 = vmatmul.mubr.f32.gmra.mxu0 %v150
        %v1208 = vpop.f32.mrf.mxu0
        %v1209 = vadd.f32 %v1138, %v1208
        %v1210 = vpop.f32.mrf.mxu0
        %v1211 = vadd.f32 %v1140, %v1210
        %1212 = vdwg.mxu0
        %1213 = vmatprep.subr.mxu0 0.0
        %1214 = vmatpush1.msra.mxu0 0.0
        %1215 = vmatprep.subr.mxu0 0.0
        %1216 = vmatpush1.msra.mxu0 0.0
        %1217 = vmatprep.subr.mxu0 0.0
        %1218 = vmatpush1.msra.mxu0 0.0
        %1219 = vmatprep.subr.mxu0 0.0
        %1220 = vmatpush1.msra.mxu0 0.0
        %1221 = vmatprep.subr.mxu0 %v850
        %1222 = vmatpush1.msra.mxu0 %v847
        %1223 = vmatprep.subr.mxu0 %v834
        %1224 = vmatpush1.msra.mxu0 %v833
        %1225 = vmatprep.subr.mxu0 %v830
        %1226 = vmatpush1.msra.mxu0 %v829
        %1227 = vmatprep.subr.mxu0 %v826
        %1228 = vmatpush1.msra.mxu0 %v825
        %1229 = vmatprep.subr.mxu0 %v822
        %1230 = vmatpush1.msra.mxu0 %v821
        %1231 = vmatprep.subr.mxu0 %v818
        %1232 = vmatpush1.msra.mxu0 %v817
        %1233 = vmatprep.subr.mxu0 %v814
        %1234 = vmatpush1.msra.mxu0 %v813
        %1235 = vmatprep.subr.mxu0 %v810
        %1236 = vmatpush1.msra.mxu0 %v809
        %1237 = vmatprep.subr.mxu0 %v806
        %1238 = vmatpush1.msra.mxu0 %v805
        %1239 = vmatprep.subr.mxu0 %v802
        %1240 = vmatpush1.msra.mxu0 %v801
        %1241 = vmatprep.subr.mxu0 %v798
        %1242 = vmatpush1.msra.mxu0 %v797
        %1243 = vmatprep.subr.mxu0 %v794
        %1244 = vmatpush1.msra.mxu0 %v793
        %1245 = vmatprep.subr.mxu0 0.0
        %1246 = vmatpush2.msra.mxu0 0.0
        %1247 = vmatprep.subr.mxu0 0.0
        %1248 = vmatpush2.msra.mxu0 0.0
        %1249 = vmatprep.subr.mxu0 0.0
        %1250 = vmatpush2.msra.mxu0 0.0
        %1251 = vmatprep.subr.mxu0 0.0
        %1252 = vmatpush2.msra.mxu0 0.0
        %1253 = vmatprep.subr.mxu0 0.0
        %1254 = vmatpush2.msra.mxu0 0.0
        %1255 = vmatprep.subr.mxu0 0.0
        %1256 = vmatpush2.msra.mxu0 0.0
        %1257 = vmatprep.subr.mxu0 0.0
        %1258 = vmatpush2.msra.mxu0 0.0
        %1259 = vmatprep.subr.mxu0 0.0
        %1260 = vmatpush2.msra.mxu0 0.0
        %1261 = vmatprep.subr.mxu0 0.0
        %1262 = vmatpush2.msra.mxu0 0.0
        %1263 = vmatprep.subr.mxu0 0.0
        %1264 = vmatpush2.msra.mxu0 0.0
        %1265 = vmatprep.subr.mxu0 0.0
        %1266 = vmatpush2.msra.mxu0 0.0
        %1267 = vmatprep.subr.mxu0 0.0
        %1268 = vmatpush2.msra.mxu0 0.0
        %1269 = vmatprep.subr.mxu0 0.0
        %1270 = vmatpush2.msra.mxu0 0.0
        %1271 = vmatprep.subr.mxu0 0.0
        %1272 = vmatpush2.msra.mxu0 0.0
        %1273 = vmatprep.subr.mxu0 0.0
        %1274 = vmatpush2.msra.mxu0 0.0
        %1275 = vmatprep.subr.mxu0 0.0
        %1276 = vmatpush2.msra.mxu0 0.0
        %1277 = vmatprep.mubr.f32.mxu0 0.0
        %1278 = vmatmul.mubr.f32.gmra.mxu0 %v843
        %v1279 = vpop.f32.mrf.mxu0
        %v1280 = vadd.f32 %v1209, %v1279
        %v1281 = vpop.f32.mrf.mxu0
        %v1282 = vadd.f32 %v1211, %v1281
        %1283 = vdwg.mxu0
        %1284 = vmatprep.subr.mxu0 %v216
        %1285 = vmatpush1.msra.mxu0 %v215
        %1286 = vmatprep.subr.mxu0 %v212
        %1287 = vmatpush1.msra.mxu0 %v211
        %1288 = vmatprep.subr.mxu0 %v208
        %1289 = vmatpush1.msra.mxu0 %v207
        %1290 = vmatprep.subr.mxu0 %v204
        %1291 = vmatpush1.msra.mxu0 %v203
        %1292 = vmatprep.subr.mxu0 %v200
        %1293 = vmatpush1.msra.mxu0 %v199
        %1294 = vmatprep.subr.mxu0 %v196
        %1295 = vmatpush1.msra.mxu0 %v195
        %1296 = vmatprep.subr.mxu0 %v192
        %1297 = vmatpush1.msra.mxu0 %v191
        %1298 = vmatprep.subr.mxu0 %v188
        %1299 = vmatpush1.msra.mxu0 %v187
        %1300 = vmatprep.subr.mxu0 %v184
        %1301 = vmatpush1.msra.mxu0 %v183
        %1302 = vmatprep.subr.mxu0 %v180
        %1303 = vmatpush1.msra.mxu0 %v179
        %1304 = vmatprep.subr.mxu0 %v176
        %1305 = vmatpush1.msra.mxu0 %v175
        %1306 = vmatprep.subr.mxu0 %v172
        %1307 = vmatpush1.msra.mxu0 %v171
        %1308 = vmatprep.subr.mxu0 %v168
        %1309 = vmatpush1.msra.mxu0 %v167
        %1310 = vmatprep.subr.mxu0 %v164
        %1311 = vmatpush1.msra.mxu0 %v163
        %1312 = vmatprep.subr.mxu0 %v160
        %1313 = vmatpush1.msra.mxu0 %v159
        %1314 = vmatprep.subr.mxu0 %v156
        %1315 = vmatpush1.msra.mxu0 %v155
        %1316 = vmatprep.subr.mxu0 %v280
        %1317 = vmatpush2.msra.mxu0 %v279
        %1318 = vmatprep.subr.mxu0 %v276
        %1319 = vmatpush2.msra.mxu0 %v275
        %1320 = vmatprep.subr.mxu0 %v272
        %1321 = vmatpush2.msra.mxu0 %v271
        %1322 = vmatprep.subr.mxu0 %v268
        %1323 = vmatpush2.msra.mxu0 %v267
        %1324 = vmatprep.subr.mxu0 %v264
        %1325 = vmatpush2.msra.mxu0 %v263
        %1326 = vmatprep.subr.mxu0 %v260
        %1327 = vmatpush2.msra.mxu0 %v259
        %1328 = vmatprep.subr.mxu0 %v256
        %1329 = vmatpush2.msra.mxu0 %v255
        %1330 = vmatprep.subr.mxu0 %v252
        %1331 = vmatpush2.msra.mxu0 %v251
        %1332 = vmatprep.subr.mxu0 %v248
        %1333 = vmatpush2.msra.mxu0 %v247
        %1334 = vmatprep.subr.mxu0 %v244
        %1335 = vmatpush2.msra.mxu0 %v243
        %1336 = vmatprep.subr.mxu0 %v240
        %1337 = vmatpush2.msra.mxu0 %v239
        %1338 = vmatprep.subr.mxu0 %v236
        %1339 = vmatpush2.msra.mxu0 %v235
        %1340 = vmatprep.subr.mxu0 %v232
        %1341 = vmatpush2.msra.mxu0 %v231
        %1342 = vmatprep.subr.mxu0 %v228
        %1343 = vmatpush2.msra.mxu0 %v227
        %1344 = vmatprep.subr.mxu0 %v224
        %1345 = vmatpush2.msra.mxu0 %v223
        %1346 = vmatprep.subr.mxu0 %v220
        %1347 = vmatpush2.msra.mxu0 %v219
        %1348 = vmatprep.mubr.f32.mxu0 %v143
        %1349 = vmatmul.mubr.f32.gmra.mxu0 %v142
        %v1350 = vpop.f32.mrf.mxu0
        %v1351 = vadd.f32 0.0, %v1350
        %v1352 = vpop.f32.mrf.mxu0
        %v1353 = vadd.f32 0.0, %v1352
        %1354 = vdwg.mxu0
        %1355 = vmatprep.subr.mxu0 %v344
        %1356 = vmatpush1.msra.mxu0 %v343
        %1357 = vmatprep.subr.mxu0 %v340
        %1358 = vmatpush1.msra.mxu0 %v339
        %1359 = vmatprep.subr.mxu0 %v336
        %1360 = vmatpush1.msra.mxu0 %v335
        %1361 = vmatprep.subr.mxu0 %v332
        %1362 = vmatpush1.msra.mxu0 %v331
        %1363 = vmatprep.subr.mxu0 %v328
        %1364 = vmatpush1.msra.mxu0 %v327
        %1365 = vmatprep.subr.mxu0 %v324
        %1366 = vmatpush1.msra.mxu0 %v323
        %1367 = vmatprep.subr.mxu0 %v320
        %1368 = vmatpush1.msra.mxu0 %v319
        %1369 = vmatprep.subr.mxu0 %v316
        %1370 = vmatpush1.msra.mxu0 %v315
        %1371 = vmatprep.subr.mxu0 %v312
        %1372 = vmatpush1.msra.mxu0 %v311
        %1373 = vmatprep.subr.mxu0 %v308
        %1374 = vmatpush1.msra.mxu0 %v307
        %1375 = vmatprep.subr.mxu0 %v304
        %1376 = vmatpush1.msra.mxu0 %v303
        %1377 = vmatprep.subr.mxu0 %v300
        %1378 = vmatpush1.msra.mxu0 %v299
        %1379 = vmatprep.subr.mxu0 %v296
        %1380 = vmatpush1.msra.mxu0 %v295
        %1381 = vmatprep.subr.mxu0 %v292
        %1382 = vmatpush1.msra.mxu0 %v291
        %1383 = vmatprep.subr.mxu0 %v288
        %1384 = vmatpush1.msra.mxu0 %v287
        %1385 = vmatprep.subr.mxu0 %v284
        %1386 = vmatpush1.msra.mxu0 %v283
        %1387 = vmatprep.subr.mxu0 %v408
        %1388 = vmatpush2.msra.mxu0 %v407
        %1389 = vmatprep.subr.mxu0 %v404
        %1390 = vmatpush2.msra.mxu0 %v403
        %1391 = vmatprep.subr.mxu0 %v400
        %1392 = vmatpush2.msra.mxu0 %v399
        %1393 = vmatprep.subr.mxu0 %v396
        %1394 = vmatpush2.msra.mxu0 %v395
        %1395 = vmatprep.subr.mxu0 %v392
        %1396 = vmatpush2.msra.mxu0 %v391
        %1397 = vmatprep.subr.mxu0 %v388
        %1398 = vmatpush2.msra.mxu0 %v387
        %1399 = vmatprep.subr.mxu0 %v384
        %1400 = vmatpush2.msra.mxu0 %v383
        %1401 = vmatprep.subr.mxu0 %v380
        %1402 = vmatpush2.msra.mxu0 %v379
        %1403 = vmatprep.subr.mxu0 %v376
        %1404 = vmatpush2.msra.mxu0 %v375
        %1405 = vmatprep.subr.mxu0 %v372
        %1406 = vmatpush2.msra.mxu0 %v371
        %1407 = vmatprep.subr.mxu0 %v368
        %1408 = vmatpush2.msra.mxu0 %v367
        %1409 = vmatprep.subr.mxu0 %v364
        %1410 = vmatpush2.msra.mxu0 %v363
        %1411 = vmatprep.subr.mxu0 %v360
        %1412 = vmatpush2.msra.mxu0 %v359
        %1413 = vmatprep.subr.mxu0 %v356
        %1414 = vmatpush2.msra.mxu0 %v355
        %1415 = vmatprep.subr.mxu0 %v352
        %1416 = vmatpush2.msra.mxu0 %v351
        %1417 = vmatprep.subr.mxu0 %v348
        %1418 = vmatpush2.msra.mxu0 %v347
        %1419 = vmatprep.mubr.f32.mxu0 %v145
        %1420 = vmatmul.mubr.f32.gmra.mxu0 %v144
        %v1421 = vpop.f32.mrf.mxu0
        %v1422 = vadd.f32 %v1351, %v1421
        %v1423 = vpop.f32.mrf.mxu0
        %v1424 = vadd.f32 %v1353, %v1423
        %1425 = vdwg.mxu0
        %1426 = vmatprep.subr.mxu0 %v472
        %1427 = vmatpush1.msra.mxu0 %v471
        %1428 = vmatprep.subr.mxu0 %v468
        %1429 = vmatpush1.msra.mxu0 %v467
        %1430 = vmatprep.subr.mxu0 %v464
        %1431 = vmatpush1.msra.mxu0 %v463
        %1432 = vmatprep.subr.mxu0 %v460
        %1433 = vmatpush1.msra.mxu0 %v459
        %1434 = vmatprep.subr.mxu0 %v456
        %1435 = vmatpush1.msra.mxu0 %v455
        %1436 = vmatprep.subr.mxu0 %v452
        %1437 = vmatpush1.msra.mxu0 %v451
        %1438 = vmatprep.subr.mxu0 %v448
        %1439 = vmatpush1.msra.mxu0 %v447
        %1440 = vmatprep.subr.mxu0 %v444
        %1441 = vmatpush1.msra.mxu0 %v443
        %1442 = vmatprep.subr.mxu0 %v440
        %1443 = vmatpush1.msra.mxu0 %v439
        %1444 = vmatprep.subr.mxu0 %v436
        %1445 = vmatpush1.msra.mxu0 %v435
        %1446 = vmatprep.subr.mxu0 %v432
        %1447 = vmatpush1.msra.mxu0 %v431
        %1448 = vmatprep.subr.mxu0 %v428
        %1449 = vmatpush1.msra.mxu0 %v427
        %1450 = vmatprep.subr.mxu0 %v424
        %1451 = vmatpush1.msra.mxu0 %v423
        %1452 = vmatprep.subr.mxu0 %v420
        %1453 = vmatpush1.msra.mxu0 %v419
        %1454 = vmatprep.subr.mxu0 %v416
        %1455 = vmatpush1.msra.mxu0 %v415
        %1456 = vmatprep.subr.mxu0 %v412
        %1457 = vmatpush1.msra.mxu0 %v411
        %1458 = vmatprep.subr.mxu0 %v536
        %1459 = vmatpush2.msra.mxu0 %v535
        %1460 = vmatprep.subr.mxu0 %v532
        %1461 = vmatpush2.msra.mxu0 %v531
        %1462 = vmatprep.subr.mxu0 %v528
        %1463 = vmatpush2.msra.mxu0 %v527
        %1464 = vmatprep.subr.mxu0 %v524
        %1465 = vmatpush2.msra.mxu0 %v523
        %1466 = vmatprep.subr.mxu0 %v520
        %1467 = vmatpush2.msra.mxu0 %v519
        %1468 = vmatprep.subr.mxu0 %v516
        %1469 = vmatpush2.msra.mxu0 %v515
        %1470 = vmatprep.subr.mxu0 %v512
        %1471 = vmatpush2.msra.mxu0 %v511
        %1472 = vmatprep.subr.mxu0 %v508
        %1473 = vmatpush2.msra.mxu0 %v507
        %1474 = vmatprep.subr.mxu0 %v504
        %1475 = vmatpush2.msra.mxu0 %v503
        %1476 = vmatprep.subr.mxu0 %v500
        %1477 = vmatpush2.msra.mxu0 %v499
        %1478 = vmatprep.subr.mxu0 %v496
        %1479 = vmatpush2.msra.mxu0 %v495
        %1480 = vmatprep.subr.mxu0 %v492
        %1481 = vmatpush2.msra.mxu0 %v491
        %1482 = vmatprep.subr.mxu0 %v488
        %1483 = vmatpush2.msra.mxu0 %v487
        %1484 = vmatprep.subr.mxu0 %v484
        %1485 = vmatpush2.msra.mxu0 %v483
        %1486 = vmatprep.subr.mxu0 %v480
        %1487 = vmatpush2.msra.mxu0 %v479
        %1488 = vmatprep.subr.mxu0 %v476
        %1489 = vmatpush2.msra.mxu0 %v475
        %1490 = vmatprep.mubr.f32.mxu0 %v147
        %1491 = vmatmul.mubr.f32.gmra.mxu0 %v146
        %v1492 = vpop.f32.mrf.mxu0
        %v1493 = vadd.f32 %v1422, %v1492
        %v1494 = vpop.f32.mrf.mxu0
        %v1495 = vadd.f32 %v1424, %v1494
        %1496 = vdwg.mxu0
        %1497 = vmatprep.subr.mxu0 %v600
        %1498 = vmatpush1.msra.mxu0 %v599
        %1499 = vmatprep.subr.mxu0 %v596
        %1500 = vmatpush1.msra.mxu0 %v595
        %1501 = vmatprep.subr.mxu0 %v592
        %1502 = vmatpush1.msra.mxu0 %v591
        %1503 = vmatprep.subr.mxu0 %v588
        %1504 = vmatpush1.msra.mxu0 %v587
        %1505 = vmatprep.subr.mxu0 %v584
        %1506 = vmatpush1.msra.mxu0 %v583
        %1507 = vmatprep.subr.mxu0 %v580
        %1508 = vmatpush1.msra.mxu0 %v579
        %1509 = vmatprep.subr.mxu0 %v576
        %1510 = vmatpush1.msra.mxu0 %v575
        %1511 = vmatprep.subr.mxu0 %v572
        %1512 = vmatpush1.msra.mxu0 %v571
        %1513 = vmatprep.subr.mxu0 %v568
        %1514 = vmatpush1.msra.mxu0 %v567
        %1515 = vmatprep.subr.mxu0 %v564
        %1516 = vmatpush1.msra.mxu0 %v563
        %1517 = vmatprep.subr.mxu0 %v560
        %1518 = vmatpush1.msra.mxu0 %v559
        %1519 = vmatprep.subr.mxu0 %v556
        %1520 = vmatpush1.msra.mxu0 %v555
        %1521 = vmatprep.subr.mxu0 %v552
        %1522 = vmatpush1.msra.mxu0 %v551
        %1523 = vmatprep.subr.mxu0 %v548
        %1524 = vmatpush1.msra.mxu0 %v547
        %1525 = vmatprep.subr.mxu0 %v544
        %1526 = vmatpush1.msra.mxu0 %v543
        %1527 = vmatprep.subr.mxu0 %v540
        %1528 = vmatpush1.msra.mxu0 %v539
        %1529 = vmatprep.subr.mxu0 %v664
        %1530 = vmatpush2.msra.mxu0 %v663
        %1531 = vmatprep.subr.mxu0 %v660
        %1532 = vmatpush2.msra.mxu0 %v659
        %1533 = vmatprep.subr.mxu0 %v656
        %1534 = vmatpush2.msra.mxu0 %v655
        %1535 = vmatprep.subr.mxu0 %v652
        %1536 = vmatpush2.msra.mxu0 %v651
        %1537 = vmatprep.subr.mxu0 %v648
        %1538 = vmatpush2.msra.mxu0 %v647
        %1539 = vmatprep.subr.mxu0 %v644
        %1540 = vmatpush2.msra.mxu0 %v643
        %1541 = vmatprep.subr.mxu0 %v640
        %1542 = vmatpush2.msra.mxu0 %v639
        %1543 = vmatprep.subr.mxu0 %v636
        %1544 = vmatpush2.msra.mxu0 %v635
        %1545 = vmatprep.subr.mxu0 %v632
        %1546 = vmatpush2.msra.mxu0 %v631
        %1547 = vmatprep.subr.mxu0 %v628
        %1548 = vmatpush2.msra.mxu0 %v627
        %1549 = vmatprep.subr.mxu0 %v624
        %1550 = vmatpush2.msra.mxu0 %v623
        %1551 = vmatprep.subr.mxu0 %v620
        %1552 = vmatpush2.msra.mxu0 %v619
        %1553 = vmatprep.subr.mxu0 %v616
        %1554 = vmatpush2.msra.mxu0 %v615
        %1555 = vmatprep.subr.mxu0 %v612
        %1556 = vmatpush2.msra.mxu0 %v611
        %1557 = vmatprep.subr.mxu0 %v608
        %1558 = vmatpush2.msra.mxu0 %v607
        %1559 = vmatprep.subr.mxu0 %v604
        %1560 = vmatpush2.msra.mxu0 %v603
        %1561 = vmatprep.mubr.f32.mxu0 %v149
        %1562 = vmatmul.mubr.f32.gmra.mxu0 %v148
        %v1563 = vpop.f32.mrf.mxu0
        %v1564 = vadd.f32 %v1493, %v1563
        %v1565 = vpop.f32.mrf.mxu0
        %v1566 = vadd.f32 %v1495, %v1565
        %1567 = vdwg.mxu0
        %1568 = vmatprep.subr.mxu0 %v728
        %1569 = vmatpush1.msra.mxu0 %v727
        %1570 = vmatprep.subr.mxu0 %v724
        %1571 = vmatpush1.msra.mxu0 %v723
        %1572 = vmatprep.subr.mxu0 %v720
        %1573 = vmatpush1.msra.mxu0 %v719
        %1574 = vmatprep.subr.mxu0 %v716
        %1575 = vmatpush1.msra.mxu0 %v715
        %1576 = vmatprep.subr.mxu0 %v712
        %1577 = vmatpush1.msra.mxu0 %v711
        %1578 = vmatprep.subr.mxu0 %v708
        %1579 = vmatpush1.msra.mxu0 %v707
        %1580 = vmatprep.subr.mxu0 %v704
        %1581 = vmatpush1.msra.mxu0 %v703
        %1582 = vmatprep.subr.mxu0 %v700
        %1583 = vmatpush1.msra.mxu0 %v699
        %1584 = vmatprep.subr.mxu0 %v696
        %1585 = vmatpush1.msra.mxu0 %v695
        %1586 = vmatprep.subr.mxu0 %v692
        %1587 = vmatpush1.msra.mxu0 %v691
        %1588 = vmatprep.subr.mxu0 %v688
        %1589 = vmatpush1.msra.mxu0 %v687
        %1590 = vmatprep.subr.mxu0 %v684
        %1591 = vmatpush1.msra.mxu0 %v683
        %1592 = vmatprep.subr.mxu0 %v680
        %1593 = vmatpush1.msra.mxu0 %v679
        %1594 = vmatprep.subr.mxu0 %v676
        %1595 = vmatpush1.msra.mxu0 %v675
        %1596 = vmatprep.subr.mxu0 %v672
        %1597 = vmatpush1.msra.mxu0 %v671
        %1598 = vmatprep.subr.mxu0 %v668
        %1599 = vmatpush1.msra.mxu0 %v667
        %1600 = vmatprep.subr.mxu0 %v792
        %1601 = vmatpush2.msra.mxu0 %v791
        %1602 = vmatprep.subr.mxu0 %v788
        %1603 = vmatpush2.msra.mxu0 %v787
        %1604 = vmatprep.subr.mxu0 %v784
        %1605 = vmatpush2.msra.mxu0 %v783
        %1606 = vmatprep.subr.mxu0 %v780
        %1607 = vmatpush2.msra.mxu0 %v779
        %1608 = vmatprep.subr.mxu0 %v776
        %1609 = vmatpush2.msra.mxu0 %v775
        %1610 = vmatprep.subr.mxu0 %v772
        %1611 = vmatpush2.msra.mxu0 %v771
        %1612 = vmatprep.subr.mxu0 %v768
        %1613 = vmatpush2.msra.mxu0 %v767
        %1614 = vmatprep.subr.mxu0 %v764
        %1615 = vmatpush2.msra.mxu0 %v763
        %1616 = vmatprep.subr.mxu0 %v760
        %1617 = vmatpush2.msra.mxu0 %v759
        %1618 = vmatprep.subr.mxu0 %v756
        %1619 = vmatpush2.msra.mxu0 %v755
        %1620 = vmatprep.subr.mxu0 %v752
        %1621 = vmatpush2.msra.mxu0 %v751
        %1622 = vmatprep.subr.mxu0 %v748
        %1623 = vmatpush2.msra.mxu0 %v747
        %1624 = vmatprep.subr.mxu0 %v744
        %1625 = vmatpush2.msra.mxu0 %v743
        %1626 = vmatprep.subr.mxu0 %v740
        %1627 = vmatpush2.msra.mxu0 %v739
        %1628 = vmatprep.subr.mxu0 %v736
        %1629 = vmatpush2.msra.mxu0 %v735
        %1630 = vmatprep.subr.mxu0 %v732
        %1631 = vmatpush2.msra.mxu0 %v731
        %1632 = vmatprep.mubr.f32.mxu0 %v151
        %1633 = vmatmul.mubr.f32.gmra.mxu0 %v150
        %v1634 = vpop.f32.mrf.mxu0
        %v1635 = vadd.f32 %v1564, %v1634
        %v1636 = vpop.f32.mrf.mxu0
        %v1637 = vadd.f32 %v1566, %v1636
        %1638 = vdwg.mxu0
        %1639 = vmatprep.subr.mxu0 0.0
        %1640 = vmatpush1.msra.mxu0 0.0
        %1641 = vmatprep.subr.mxu0 0.0
        %1642 = vmatpush1.msra.mxu0 0.0
        %1643 = vmatprep.subr.mxu0 0.0
        %1644 = vmatpush1.msra.mxu0 0.0
        %1645 = vmatprep.subr.mxu0 0.0
        %1646 = vmatpush1.msra.mxu0 0.0
        %1647 = vmatprep.subr.mxu0 %v856
        %1648 = vmatpush1.msra.mxu0 %v853
        %1649 = vmatprep.subr.mxu0 %v836
        %1650 = vmatpush1.msra.mxu0 %v835
        %1651 = vmatprep.subr.mxu0 %v832
        %1652 = vmatpush1.msra.mxu0 %v831
        %1653 = vmatprep.subr.mxu0 %v828
        %1654 = vmatpush1.msra.mxu0 %v827
        %1655 = vmatprep.subr.mxu0 %v824
        %1656 = vmatpush1.msra.mxu0 %v823
        %1657 = vmatprep.subr.mxu0 %v820
        %1658 = vmatpush1.msra.mxu0 %v819
        %1659 = vmatprep.subr.mxu0 %v816
        %1660 = vmatpush1.msra.mxu0 %v815
        %1661 = vmatprep.subr.mxu0 %v812
        %1662 = vmatpush1.msra.mxu0 %v811
        %1663 = vmatprep.subr.mxu0 %v808
        %1664 = vmatpush1.msra.mxu0 %v807
        %1665 = vmatprep.subr.mxu0 %v804
        %1666 = vmatpush1.msra.mxu0 %v803
        %1667 = vmatprep.subr.mxu0 %v800
        %1668 = vmatpush1.msra.mxu0 %v799
        %1669 = vmatprep.subr.mxu0 %v796
        %1670 = vmatpush1.msra.mxu0 %v795
        %1671 = vmatprep.subr.mxu0 0.0
        %1672 = vmatpush2.msra.mxu0 0.0
        %1673 = vmatprep.subr.mxu0 0.0
        %1674 = vmatpush2.msra.mxu0 0.0
        %1675 = vmatprep.subr.mxu0 0.0
        %1676 = vmatpush2.msra.mxu0 0.0
        %1677 = vmatprep.subr.mxu0 0.0
        %1678 = vmatpush2.msra.mxu0 0.0
        %1679 = vmatprep.subr.mxu0 0.0
        %1680 = vmatpush2.msra.mxu0 0.0
        %1681 = vmatprep.subr.mxu0 0.0
        %1682 = vmatpush2.msra.mxu0 0.0
        %1683 = vmatprep.subr.mxu0 0.0
        %1684 = vmatpush2.msra.mxu0 0.0
        %1685 = vmatprep.subr.mxu0 0.0
        %1686 = vmatpush2.msra.mxu0 0.0
        %1687 = vmatprep.subr.mxu0 0.0
        %1688 = vmatpush2.msra.mxu0 0.0
        %1689 = vmatprep.subr.mxu0 0.0
        %1690 = vmatpush2.msra.mxu0 0.0
        %1691 = vmatprep.subr.mxu0 0.0
        %1692 = vmatpush2.msra.mxu0 0.0
        %1693 = vmatprep.subr.mxu0 0.0
        %1694 = vmatpush2.msra.mxu0 0.0
        %1695 = vmatprep.subr.mxu0 0.0
        %1696 = vmatpush2.msra.mxu0 0.0
        %1697 = vmatprep.subr.mxu0 0.0
        %1698 = vmatpush2.msra.mxu0 0.0
        %1699 = vmatprep.subr.mxu0 0.0
        %1700 = vmatpush2.msra.mxu0 0.0
        %1701 = vmatprep.subr.mxu0 0.0
        %1702 = vmatpush2.msra.mxu0 0.0
        %1703 = vmatprep.mubr.f32.mxu0 0.0
        %1704 = vmatmul.mubr.f32.gmra.mxu0 %v843
        %v1705 = vpop.f32.mrf.mxu0
        %v1706 = vadd.f32 %v1635, %v1705
        %v1707 = vpop.f32.mrf.mxu0
        %v1708 = vadd.f32 %v1637, %v1707
        %1709 = vdwg.mxu0
        %v1710 = vadd.f32 %v1280, %v1282
        %v1711 = vadd.f32 %v1710, %v1706
        %v1712 = vadd.f32 %v1711, %v1708
        %1713 = vadd.xlane.f32.xlu0 %v1712
        %v1714 = vpop.xlane.xlu0 %1713
        %v1715 = vrcp.pop 512.0
        %v1716 = vmul.f32 %v1714, %v1715
        %v1717 = vsub.f32 %v1280, %v1716
        %v1718 = vsub.f32 %v1282, %v1716
        %v1719 = vsub.f32 %v1706, %v1716
        %v1720 = vsub.f32 %v1708, %v1716
        %v1721 = vmul.f32 %v1717, %v1717
        %v1722 = vmul.f32 %v1718, %v1718
        %v1723 = vmul.f32 %v1719, %v1719
        %v1724 = vmul.f32 %v1720, %v1720
        %v1725 = vadd.f32 %v1721, %v1722
        %v1726 = vadd.f32 %v1725, %v1723
        %v1727 = vadd.f32 %v1726, %v1724
        %1728 = vadd.xlane.f32.xlu0 %v1727
        %v1729 = vpop.xlane.xlu0 %1728
        %v1730 = vmul.f32 %v1729, %v1715
        %v1731 = vadd.f32 %v1730, 1e-05
        %v1732 = vrsqrt.pop %v1731
        %v1733 = vmul.f32 %v1717, %v1732
        %v1734 = vmul.f32 %v1718, %v1732
        %v1735 = vmul.f32 %v1719, %v1732
        %v1736 = vmul.f32 %v1720, %v1732
        %vm1737 = vcmp.ge.f32.partialorder %v1733, 0.0
        %vm1738 = vcmp.ge.f32.partialorder %v1734, 0.0
        %vm1739 = vcmp.ge.f32.partialorder %v1735, 0.0
        %vm1740 = vcmp.ge.f32.partialorder %v1736, 0.0
        %v1741 = vmul.f32 %v1733, 0.01
        %v1742 = vmul.f32 %v1734, 0.01
        %v1743 = vmul.f32 %v1735, 0.01
        %v1744 = vmul.f32 %v1736, 0.01
        %v1745 = vsel %vm1737, %v1733, %v1741
        %v1746 = vsel %vm1738, %v1734, %v1742
        %v1747 = vsel %vm1739, %v1735, %v1743
        %v1748 = vsel %vm1740, %v1736, %v1744
        %1749 = vst [vmem:[%s136] sm:$0xff] %v1745
        %1750 = vst [vmem:[%s136 + $0x8] sm:$0xff] %v1746
        %1751 = vst [vmem:[%s136 + $0x10] sm:$0xff] %v1747
        %1752 = vst [vmem:[%s136 + $0x18] sm:$0xff] %v1748
        %s1753 = sand.u32 %s71, 1
        %s1754 = scalar_lea.sflag [#allocation3], %s1753
        %s1755 = sand.u32 %s71, 1
        %s1756 = smul.addr %s1755, 32
        %s1757 = scalar_lea.vmem [#allocation2], %s1756
        // Predicated region
        $region29: #{tpu_custom_call.1} parent=27 // pred_check
          %p1758 = pneg %p81
        $region30: #{tpu_custom_call.1} parent=27 // pred_check_branch
          %1760 = sbr.rel (%p1758) target = $region32
        $region31: #{tpu_custom_call.1} parent=27 // pred_region
          %s1762 = ssub.s32 512, 512
          %1763 = vsyncadd %s1754, %s1762
          %s1764 = smul.addr %s16, 4
          %s1765 = smul.addr %s1764, 128
          %s1766 = scalar_lea.hbm %s2, %s1765
          %s1768 = sshll.u32 %s1757, 4
          %s1769 = int_to_ptr.vmem [resolvable:$true] %s1768
          %1771 = dma.vmem_to_hbm [thread:$0]  %s1769, 512, %s1766, %s1754
        $region32: #{tpu_custom_call.1} parent=27 // pred_fallthru
          _
      $region28: #{tpu_custom_call.1} parent=5 // pred_fallthru
        _
      %p1772 = scmp.le.s32.totalorder 2, %s11
      // Predicated region
      $region33: #{tpu_custom_call.1} parent=5 // pred_check
        %p1773 = pneg %p1772
      $region34: #{tpu_custom_call.1} parent=5 // pred_check_branch
        %1775 = sbr.rel (%p1773) target = $region36
      $region35: #{tpu_custom_call.1} parent=5 // pred_region
        %s1776 = ssub.s32 %s11, 2
        // Predicated region
        $region37: #{tpu_custom_call.1} parent=35 // pred_check
          %p1777 = pneg %p87
        $region38: #{tpu_custom_call.1} parent=35 // pred_check_branch
          %1779 = sbr.rel (%p1777) target = $region40
        $region39: #{tpu_custom_call.1} parent=35 // pred_region
          %s1780 = sand.u32 %s72, 1
          %s1781 = scalar_lea.sflag [#allocation3], %s1780
          %s1782 = sand.u32 %s72, 1
          %s1783 = smul.addr %s1782, 32
          %s1784 = scalar_lea.vmem [#allocation2], %s1783
          %1785 = dma.done %s1781, 512
        $region40: #{tpu_custom_call.1} parent=35 // pred_fallthru
          _
      $region36: #{tpu_custom_call.1} parent=5 // pred_fallthru
        _
    $region6: #{tpu_custom_call.1} parent=1 // loop_footer
      %s15 = sadd.s32 1, %s11
    $region7: #{tpu_custom_call.1} parent=1 // loop_footer_branch
      %10 = sbr.rel target = $region3
    $region8: #{tpu_custom_call.1} parent=1 // loop_exit
      _
    %1786 = vsyncpa [#allocation3], 1
    %s1787 = scalar_lea.sflag [#allocation3], 1
    %1788 = vsyncpa %s1787, 1

</llo_original>
